<compile_context>
chip_gen: v5e
topology: v5e:2x2
jax: 0.10.0
libtpu: 0.0.40
codegen_flags: <defaults>
</compile_context>

<pallas_src>
import functools

import jax
import jax.numpy as jnp
from jax import lax
from jax.experimental import pallas as pl


# ----------------------------- config (small) -----------------------------
HIDDEN = 32
INTERMEDIATE = 64
NUM_LAYERS = 2
NUM_HEADS = 4
HEAD_DIM = HIDDEN // NUM_HEADS
NUM_CHANNELS = 3
IMAGE_SIZE = 16
PATCH_SIZE = 4
NUM_PATCHES = (IMAGE_SIZE // PATCH_SIZE) ** 2       # 16
PATCH_DIM = NUM_CHANNELS * PATCH_SIZE * PATCH_SIZE  # 48
LN_EPS = 1e-6
BATCH = 2
LANES = 128                                          # slab lane width

# -------- packed-slab row layout (shared by pack_params and the kernel) ----
# vector slab: one row per (1, width) vector, zero-padded to 128 lanes
VEC_BPATCH, VEC_POSTG, VEC_POSTB, VEC_GLOBAL_ROWS = 0, 1, 2, 3
VG1, VBE1, VBQKV, VBO, VG2, VBE2, VB1, VB2 = range(8)
VEC_LAYER_ROWS = 8
# weight slab: w_patch rows [0:48], then per layer [wqkv | wo | w1 | w2],
# then the positional embedding; all zero-padded to 128 lanes.


# ------------------------------ kernel helpers -----------------------------
def _layernorm(x, gamma, beta, eps):
    mu = jnp.mean(x, axis=-1, keepdims=True)
    var = jnp.mean((x - mu) ** 2, axis=-1, keepdims=True)
    return (x - mu) * lax.rsqrt(var + eps) * gamma + beta


def _gelu_tanh(x):
    # gelu_pytorch_tanh
    c = 0.7978845608028654  # sqrt(2/pi)
    return 0.5 * x * (1.0 + jnp.tanh(c * (x + 0.044715 * x * x * x)))


# ------------------------------- fused kernel ------------------------------
def fused_siglip_kernel(patch_ref, vec_ref, wts_ref, o_ref, *,
                        batch, seq, hidden, inter, num_heads, num_layers, eps):
    D, I = hidden, inter
    head_dim = D // num_heads
    rows = batch * seq
    pdim = patch_ref.shape[1]
    wt_layer_rows = 3 * D + I                       # wqkv(D)+wo(D)+w1(D)+w2(I)
    pos_row = pdim + num_layers * wt_layer_rows

    def vec(row, width):                            # (1, width) broadcast row
        return vec_ref[row:row + 1, 0:width]

    # ---- embeddings: patch "conv" as one matmul + bias + positional -------
    w_patch = wts_ref[0:pdim, 0:D]
    x = jnp.dot(patch_ref[...], w_patch, preferred_element_type=jnp.float32)
    x = x + vec(VEC_BPATCH, D)
    pos = wts_ref[pos_row:pos_row + seq, 0:D]                         # (N, D)
    # broadcast positional embedding over batch via a leading-dim view
    x = (x.reshape(batch, seq, D) + pos[None, :, :]).reshape(rows, D)

    # ---- encoder -----------------------------------------------------------
    # NOTE: the reference SiglipEncoder does NOT chain hidden_states between
    # layers (it is never re-assigned); every layer consumes the embeddings
    # and only the last layer's output is returned.  The loop below mirrors
    # that exactly — earlier layers are dead pure compute and get DCE'd.
    scale = head_dim ** -0.5
    y = x
    for l in range(num_layers):
        vbase = VEC_GLOBAL_ROWS + l * VEC_LAYER_ROWS
        wbase = pdim + l * wt_layer_rows
        wqkv = wts_ref[wbase:wbase + D, 0:3 * D]                    # (D, 3D)
        wo = wts_ref[wbase + D:wbase + 2 * D, 0:D]                  # (D, D)
        w1 = wts_ref[wbase + 2 * D:wbase + 3 * D, 0:I]              # (D, I)
        w2 = wts_ref[wbase + 3 * D:wbase + 3 * D + I, 0:D]          # (I, D)

        # layer_norm1 + fused QKV projection (one (rows,D)x(D,3D) MXU push)
        h = _layernorm(x, vec(vbase + VG1, D), vec(vbase + VBE1, D), eps)
        qkv = (jnp.dot(h, wqkv, preferred_element_type=jnp.float32)
               + vec(vbase + VBQKV, 3 * D))
        q, k, v = qkv[:, 0:D], qkv[:, D:2 * D], qkv[:, 2 * D:3 * D]

        # attention: per-head loop, batch-parallel einsums; head recombination
        # folded into the out-projection -> no lane-axis concatenates.
        attn = jnp.zeros((rows, D), jnp.float32)
        for hh in range(num_heads):
            c0 = hh * head_dim
            qh = q[:, c0:c0 + head_dim].reshape(batch, seq, head_dim)
            kh = k[:, c0:c0 + head_dim].reshape(batch, seq, head_dim)
            vh = v[:, c0:c0 + head_dim].reshape(batch, seq, head_dim)
            s = jnp.einsum('bqd,bkd->bqk', qh, kh,
                           preferred_element_type=jnp.float32) * scale
            m = jnp.max(s, axis=-1, keepdims=True)
            e = jnp.exp(s - m)
            p = e / jnp.sum(e, axis=-1, keepdims=True)      # exact softmax
            oh = jnp.einsum('bqk,bkd->bqd', p, vh,
                            preferred_element_type=jnp.float32)
            attn = attn + jnp.dot(oh.reshape(rows, head_dim),
                                  wo[c0:c0 + head_dim, :],
                                  preferred_element_type=jnp.float32)
        x1 = x + (attn + vec(vbase + VBO, D))

        # layer_norm2 + MLP + residual
        h2 = _layernorm(x1, vec(vbase + VG2, D), vec(vbase + VBE2, D), eps)
        a = jnp.dot(h2, w1, preferred_element_type=jnp.float32) + vec(vbase + VB1, I)
        a = _gelu_tanh(a)
        y = x1 + (jnp.dot(a, w2, preferred_element_type=jnp.float32)
                  + vec(vbase + VB2, D))
        # (per the spec: x is NOT updated — every layer reads the embeddings)

    # ---- post layernorm ----------------------------------------------------
    # TODO(synk): at real SigLIP sizes (D=1152 = 9*128) this store is already
    # lane-dense; at toy D=32 the (32,32)->(8,128) relayout-before-store costs
    # the same sublane->lane relayout it would remove, so the (rows, D) store
    # is kept.
    o_ref[...] = _layernorm(y, vec(VEC_POSTG, D), vec(VEC_POSTB, D), eps)


# --------------------------- parameter construction ------------------------
def init_params(key):
    keys = iter(jax.random.split(key, 64))

    def rnd(shape, scale=0.02):
        return (scale * jax.random.normal(next(keys), shape)).astype(jnp.float32)

    params = {
        # conv weight stored pre-transposed: (C*P*P, D); original torch shape
        # is (D, C, P, P) — contraction order (C, P, P) preserved.
        "w_patch": rnd((PATCH_DIM, HIDDEN)),
        "b_patch": rnd((1, HIDDEN)),
        "pos_emb": rnd((NUM_PATCHES, HIDDEN)),
        "post_g": jnp.ones((1, HIDDEN), jnp.float32),
        "post_b": jnp.zeros((1, HIDDEN), jnp.float32),
        "layers": [],
    }
    for _ in range(NUM_LAYERS):
        params["layers"].append({
            "g1": jnp.ones((1, HIDDEN), jnp.float32),
            "be1": jnp.zeros((1, HIDDEN), jnp.float32),
            "wq": rnd((HIDDEN, HIDDEN)), "bq": rnd((1, HIDDEN)),
            "wk": rnd((HIDDEN, HIDDEN)), "bk": rnd((1, HIDDEN)),
            "wv": rnd((HIDDEN, HIDDEN)), "bv": rnd((1, HIDDEN)),
            "wo": rnd((HIDDEN, HIDDEN)), "bo": rnd((1, HIDDEN)),
            "g2": jnp.ones((1, HIDDEN), jnp.float32),
            "be2": jnp.zeros((1, HIDDEN), jnp.float32),
            "w1": rnd((HIDDEN, INTERMEDIATE)), "b1": rnd((1, INTERMEDIATE)),
            "w2": rnd((INTERMEDIATE, HIDDEN)), "b2": rnd((1, HIDDEN)),
        })
    return params


def _pad_lanes(a, lanes=LANES):
    return jnp.pad(a, ((0, 0), (0, lanes - a.shape[-1])))


def pack_params(params):
    """One-time packing of every parameter into two 128-lane VMEM slabs."""
    # vector slab (24, 128): [b_patch, post_g, post_b] + per-layer
    # [g1, be1, bqkv, bo, g2, be2, b1, b2]  (QKV biases fused at init).
    rows = [params["b_patch"], params["post_g"], params["post_b"]]
    for L in params["layers"]:
        bqkv = jnp.concatenate([L["bq"], L["bk"], L["bv"]], axis=1)
        rows += [L["g1"], L["be1"], bqkv, L["bo"],
                 L["g2"], L["be2"], L["b1"], L["b2"]]
    vecs = jnp.concatenate([_pad_lanes(r) for r in rows], axis=0)
    vecs = jnp.pad(vecs, ((0, (-vecs.shape[0]) % 8), (0, 0)))

    # weight slab (384, 128): w_patch + per-layer [wqkv, wo, w1, w2] + pos_emb
    # (QKV weights fused at init; all row offsets are multiples of 8).
    mats = [params["w_patch"]]
    for L in params["layers"]:
        wqkv = jnp.concatenate([L["wq"], L["wk"], L["wv"]], axis=1)
        mats += [wqkv, L["wo"], L["w1"], L["w2"]]
    mats.append(params["pos_emb"])
    wts = jnp.concatenate([_pad_lanes(m) for m in mats], axis=0)
    wts = jnp.pad(wts, ((0, (-wts.shape[0]) % 8), (0, 0)))
    return {"vecs": vecs, "wts": wts}


# ------------------------------- full forward ------------------------------
def extract_patches(pixel_values):
    # (B, C, H, W) -> (B*N_patches, C*P*P) with per-patch ordering (C, P, P),
    # patch index row-major over (H/P, W/P)  [matches Conv2d + flatten(2).T].
    B, C, H, W = pixel_values.shape
    P = PATCH_SIZE
    x = pixel_values.reshape(B, C, H // P, P, W // P, P)
    x = jnp.transpose(x, (0, 2, 4, 1, 3, 5))          # (B, Hp, Wp, C, P, P)
    return x.reshape(B * (H // P) * (W // P), C * P * P)


@jax.jit
def siglip_vision_forward(pixel_values, packed):
    B = pixel_values.shape[0]
    patches = extract_patches(pixel_values)            # (B*N, C*P*P)

    kern = functools.partial(
        fused_siglip_kernel, batch=B, seq=NUM_PATCHES, hidden=HIDDEN,
        inter=INTERMEDIATE, num_heads=NUM_HEADS, num_layers=NUM_LAYERS,
        eps=LN_EPS)

    # Single no-grid invocation: the three operands (~210 KiB total) are each
    # one whole-array HBM->VMEM DMA and stay resident for the entire kernel.
    out2d = pl.pallas_call(
        kern,
        out_shape=jax.ShapeDtypeStruct((B * NUM_PATCHES, HIDDEN), jnp.float32),
    )(patches, packed["vecs"], packed["wts"])

    return out2d.reshape(B, NUM_PATCHES, HIDDEN)


# ------------------------------------ main ----------------------------------
if __name__ == "__main__":
    key = jax.random.PRNGKey(0)
    kx, kp = jax.random.split(key)
    pixel_values = jax.random.normal(
        kx, (BATCH, NUM_CHANNELS, IMAGE_SIZE, IMAGE_SIZE), dtype=jnp.float32)
    params = init_params(kp)
    packed = pack_params(params)   # one-time slab packing (not per forward)

    out = siglip_vision_forward(pixel_values, packed)
    out = jax.block_until_ready(out)
    assert out.shape == (BATCH, NUM_PATCHES, HIDDEN)
    assert out.dtype == jnp.float32
    print("KERNEL_OK")
</pallas_src>

<mosaic_0001>
module attributes {stable_mosaic.version = 11 : i64} {
  func.func @fused_siglip_kernel(%arg0: memref<32x48xf32, #tpu.memory_space<vmem>>, %arg1: memref<24x128xf32, #tpu.memory_space<vmem>>, %arg2: memref<384x128xf32, #tpu.memory_space<vmem>>, %arg3: memref<32x32xf32, #tpu.memory_space<vmem>>) attributes {dimension_semantics = [], scalar_prefetch = 0 : i64, scratch_operands = 0 : i64, tpu.core_type = #tpu.core_type<tc>} {
    %c0 = arith.constant 0 : index
    %c0_0 = arith.constant 0 : index
    %0 = vector.load %arg2[%c0, %c0_0] : memref<384x128xf32, #tpu.memory_space<vmem>>, vector<48x32xf32>
    %c0_1 = arith.constant 0 : index
    %c0_2 = arith.constant 0 : index
    %1 = vector.load %arg0[%c0_1, %c0_2] : memref<32x48xf32, #tpu.memory_space<vmem>>, vector<32x48xf32>
    %cst = arith.constant dense<0.000000e+00> : vector<32x32xf32>
    %2 = tpu.matmul %1, %0, %cst {dimension_numbers = #tpu.dot_dimension_numbers<[1], [0], [0], [1], [0, 0, 1, 1], [], []>} : vector<32x48xf32>, vector<48x32xf32>, vector<32x32xf32> -> vector<32x32xf32>
    %c0_3 = arith.constant 0 : index
    %c0_4 = arith.constant 0 : index
    %3 = vector.load %arg1[%c0_3, %c0_4] : memref<24x128xf32, #tpu.memory_space<vmem>>, vector<1x32xf32>
    %4 = vector.broadcast %3 : vector<1x32xf32> to vector<32x32xf32>
    %5 = arith.addf %2, %4 : vector<32x32xf32>
    %c368 = arith.constant 368 : index
    %c0_5 = arith.constant 0 : index
    %6 = vector.load %arg2[%c368, %c0_5] : memref<384x128xf32, #tpu.memory_space<vmem>>, vector<16x32xf32>
    %7 = vector.shape_cast %5 : vector<32x32xf32> to vector<2x16x32xf32>
    %8 = vector.shape_cast %6 : vector<16x32xf32> to vector<1x16x32xf32>
    %9 = vector.broadcast %8 : vector<1x16x32xf32> to vector<2x16x32xf32>
    %10 = arith.addf %7, %9 : vector<2x16x32xf32>
    %11 = vector.shape_cast %10 : vector<2x16x32xf32> to vector<32x32xf32>
    %c208 = arith.constant 208 : index
    %c0_6 = arith.constant 0 : index
    %12 = vector.load %arg2[%c208, %c0_6] : memref<384x128xf32, #tpu.memory_space<vmem>>, vector<32x96xf32>
    %c240 = arith.constant 240 : index
    %c0_7 = arith.constant 0 : index
    %13 = vector.load %arg2[%c240, %c0_7] : memref<384x128xf32, #tpu.memory_space<vmem>>, vector<32x32xf32>
    %c272 = arith.constant 272 : index
    %c0_8 = arith.constant 0 : index
    %14 = vector.load %arg2[%c272, %c0_8] : memref<384x128xf32, #tpu.memory_space<vmem>>, vector<32x64xf32>
    %c304 = arith.constant 304 : index
    %c0_9 = arith.constant 0 : index
    %15 = vector.load %arg2[%c304, %c0_9] : memref<384x128xf32, #tpu.memory_space<vmem>>, vector<64x32xf32>
    %c11 = arith.constant 11 : index
    %c0_10 = arith.constant 0 : index
    %16 = vector.load %arg1[%c11, %c0_10] : memref<24x128xf32, #tpu.memory_space<vmem>>, vector<1x32xf32>
    %c12 = arith.constant 12 : index
    %c0_11 = arith.constant 0 : index
    %17 = vector.load %arg1[%c12, %c0_11] : memref<24x128xf32, #tpu.memory_space<vmem>>, vector<1x32xf32>
    %cst_12 = arith.constant dense<0.000000e+00> : vector<32xf32>
    %18 = vector.multi_reduction <add>, %11, %cst_12 [1] : vector<32x32xf32> to vector<32xf32>
    %19 = vector.shape_cast %18 : vector<32xf32> to vector<32x1xf32>
    %cst_13 = arith.constant 3.200000e+01 : f32
    %20 = vector.broadcast %cst_13 : f32 to vector<32x1xf32>
    %21 = arith.divf %19, %20 : vector<32x1xf32>
    %22 = vector.broadcast %21 : vector<32x1xf32> to vector<32x32xf32>
    %23 = arith.subf %11, %22 : vector<32x32xf32>
    %24 = arith.mulf %23, %23 : vector<32x32xf32>
    %cst_14 = arith.constant dense<0.000000e+00> : vector<32xf32>
    %25 = vector.multi_reduction <add>, %24, %cst_14 [1] : vector<32x32xf32> to vector<32xf32>
    %26 = vector.shape_cast %25 : vector<32xf32> to vector<32x1xf32>
    %cst_15 = arith.constant 3.200000e+01 : f32
    %27 = vector.broadcast %cst_15 : f32 to vector<32x1xf32>
    %28 = arith.divf %26, %27 : vector<32x1xf32>
    %29 = vector.broadcast %21 : vector<32x1xf32> to vector<32x32xf32>
    %30 = arith.subf %11, %29 : vector<32x32xf32>
    %cst_16 = arith.constant 9.99999997E-7 : f32
    %31 = vector.broadcast %cst_16 : f32 to vector<32x1xf32>
    %32 = arith.addf %28, %31 : vector<32x1xf32>
    %33 = math.rsqrt %32 : vector<32x1xf32>
    %34 = vector.broadcast %33 : vector<32x1xf32> to vector<32x32xf32>
    %35 = arith.mulf %30, %34 : vector<32x32xf32>
    %36 = vector.broadcast %16 : vector<1x32xf32> to vector<32x32xf32>
    %37 = arith.mulf %35, %36 : vector<32x32xf32>
    %38 = vector.broadcast %17 : vector<1x32xf32> to vector<32x32xf32>
    %39 = arith.addf %37, %38 : vector<32x32xf32>
    %cst_17 = arith.constant dense<0.000000e+00> : vector<32x96xf32>
    %40 = tpu.matmul %39, %12, %cst_17 {dimension_numbers = #tpu.dot_dimension_numbers<[1], [0], [0], [1], [0, 0, 1, 1], [], []>} : vector<32x32xf32>, vector<32x96xf32>, vector<32x96xf32> -> vector<32x96xf32>
    %c13 = arith.constant 13 : index
    %c0_18 = arith.constant 0 : index
    %41 = vector.load %arg1[%c13, %c0_18] : memref<24x128xf32, #tpu.memory_space<vmem>>, vector<1x96xf32>
    %42 = vector.broadcast %41 : vector<1x96xf32> to vector<32x96xf32>
    %43 = arith.addf %40, %42 : vector<32x96xf32>
    %44 = vector.extract_strided_slice %43 {offsets = [0, 0], sizes = [32, 32], strides = [1, 1]} : vector<32x96xf32> to vector<32x32xf32>
    %45 = vector.extract_strided_slice %43 {offsets = [0, 32], sizes = [32, 32], strides = [1, 1]} : vector<32x96xf32> to vector<32x32xf32>
    %46 = vector.extract_strided_slice %43 {offsets = [0, 64], sizes = [32, 32], strides = [1, 1]} : vector<32x96xf32> to vector<32x32xf32>
    %cst_19 = arith.constant 0.000000e+00 : f32
    %47 = vector.broadcast %cst_19 : f32 to vector<32x32xf32>
    %48 = vector.extract_strided_slice %44 {offsets = [0, 0], sizes = [32, 8], strides = [1, 1]} : vector<32x32xf32> to vector<32x8xf32>
    %49 = vector.shape_cast %48 : vector<32x8xf32> to vector<2x16x8xf32>
    %50 = vector.extract_strided_slice %45 {offsets = [0, 0], sizes = [32, 8], strides = [1, 1]} : vector<32x32xf32> to vector<32x8xf32>
    %51 = vector.shape_cast %50 : vector<32x8xf32> to vector<2x16x8xf32>
    %52 = vector.extract_strided_slice %46 {offsets = [0, 0], sizes = [32, 8], strides = [1, 1]} : vector<32x32xf32> to vector<32x8xf32>
    %53 = vector.shape_cast %52 : vector<32x8xf32> to vector<2x16x8xf32>
    "tpu.trace_start"() <{level = 10 : i32, message = "bqd,bkd->bqk"}> : () -> ()
    %cst_20 = arith.constant dense<0.000000e+00> : vector<2x16x16xf32>
    %54 = tpu.matmul %49, %51, %cst_20 {dimension_numbers = #tpu.dot_dimension_numbers<[2], [2], [1], [1], [0, 0, 0, 1, 1, 1], [0], [0]>} : vector<2x16x8xf32>, vector<2x16x8xf32>, vector<2x16x16xf32> -> vector<2x16x16xf32>
    "tpu.trace_stop"() : () -> ()
    %cst_21 = arith.constant 0.353553385 : f32
    %55 = vector.broadcast %cst_21 : f32 to vector<2x16x16xf32>
    %56 = arith.mulf %54, %55 : vector<2x16x16xf32>
    %cst_22 = arith.constant dense<0xFF800000> : vector<2x16xf32>
    %57 = vector.multi_reduction <maximumf>, %56, %cst_22 [2] : vector<2x16x16xf32> to vector<2x16xf32>
    %58 = vector.shape_cast %57 : vector<2x16xf32> to vector<2x16x1xf32>
    %59 = vector.broadcast %58 : vector<2x16x1xf32> to vector<2x16x16xf32>
    %60 = arith.subf %56, %59 : vector<2x16x16xf32>
    %61 = math.exp %60 : vector<2x16x16xf32>
    %cst_23 = arith.constant dense<0.000000e+00> : vector<2x16xf32>
    %62 = vector.multi_reduction <add>, %61, %cst_23 [2] : vector<2x16x16xf32> to vector<2x16xf32>
    %63 = vector.shape_cast %62 : vector<2x16xf32> to vector<2x16x1xf32>
    %64 = vector.broadcast %63 : vector<2x16x1xf32> to vector<2x16x16xf32>
    %65 = arith.divf %61, %64 : vector<2x16x16xf32>
    "tpu.trace_start"() <{level = 10 : i32, message = "bqk,bkd->bqd"}> : () -> ()
    %cst_24 = arith.constant dense<0.000000e+00> : vector<2x16x8xf32>
    %66 = tpu.matmul %65, %53, %cst_24 {dimension_numbers = #tpu.dot_dimension_numbers<[2], [1], [1], [2], [0, 0, 0, 1, 1, 2], [0], [0]>} : vector<2x16x16xf32>, vector<2x16x8xf32>, vector<2x16x8xf32> -> vector<2x16x8xf32>
    "tpu.trace_stop"() : () -> ()
    %67 = vector.shape_cast %66 : vector<2x16x8xf32> to vector<32x8xf32>
    %68 = vector.extract_strided_slice %13 {offsets = [0, 0], sizes = [8, 32], strides = [1, 1]} : vector<32x32xf32> to vector<8x32xf32>
    %cst_25 = arith.constant dense<0.000000e+00> : vector<32x32xf32>
    %69 = tpu.matmul %67, %68, %cst_25 {dimension_numbers = #tpu.dot_dimension_numbers<[1], [0], [0], [1], [0, 0, 1, 1], [], []>} : vector<32x8xf32>, vector<8x32xf32>, vector<32x32xf32> -> vector<32x32xf32>
    %70 = arith.addf %47, %69 : vector<32x32xf32>
    %71 = vector.extract_strided_slice %44 {offsets = [0, 8], sizes = [32, 8], strides = [1, 1]} : vector<32x32xf32> to vector<32x8xf32>
    %72 = vector.shape_cast %71 : vector<32x8xf32> to vector<2x16x8xf32>
    %73 = vector.extract_strided_slice %45 {offsets = [0, 8], sizes = [32, 8], strides = [1, 1]} : vector<32x32xf32> to vector<32x8xf32>
    %74 = vector.shape_cast %73 : vector<32x8xf32> to vector<2x16x8xf32>
    %75 = vector.extract_strided_slice %46 {offsets = [0, 8], sizes = [32, 8], strides = [1, 1]} : vector<32x32xf32> to vector<32x8xf32>
    %76 = vector.shape_cast %75 : vector<32x8xf32> to vector<2x16x8xf32>
    "tpu.trace_start"() <{level = 10 : i32, message = "bqd,bkd->bqk"}> : () -> ()
    %cst_26 = arith.constant dense<0.000000e+00> : vector<2x16x16xf32>
    %77 = tpu.matmul %72, %74, %cst_26 {dimension_numbers = #tpu.dot_dimension_numbers<[2], [2], [1], [1], [0, 0, 0, 1, 1, 1], [0], [0]>} : vector<2x16x8xf32>, vector<2x16x8xf32>, vector<2x16x16xf32> -> vector<2x16x16xf32>
    "tpu.trace_stop"() : () -> ()
    %cst_27 = arith.constant 0.353553385 : f32
    %78 = vector.broadcast %cst_27 : f32 to vector<2x16x16xf32>
    %79 = arith.mulf %77, %78 : vector<2x16x16xf32>
    %cst_28 = arith.constant dense<0xFF800000> : vector<2x16xf32>
    %80 = vector.multi_reduction <maximumf>, %79, %cst_28 [2] : vector<2x16x16xf32> to vector<2x16xf32>
    %81 = vector.shape_cast %80 : vector<2x16xf32> to vector<2x16x1xf32>
    %82 = vector.broadcast %81 : vector<2x16x1xf32> to vector<2x16x16xf32>
    %83 = arith.subf %79, %82 : vector<2x16x16xf32>
    %84 = math.exp %83 : vector<2x16x16xf32>
    %cst_29 = arith.constant dense<0.000000e+00> : vector<2x16xf32>
    %85 = vector.multi_reduction <add>, %84, %cst_29 [2] : vector<2x16x16xf32> to vector<2x16xf32>
    %86 = vector.shape_cast %85 : vector<2x16xf32> to vector<2x16x1xf32>
    %87 = vector.broadcast %86 : vector<2x16x1xf32> to vector<2x16x16xf32>
    %88 = arith.divf %84, %87 : vector<2x16x16xf32>
    "tpu.trace_start"() <{level = 10 : i32, message = "bqk,bkd->bqd"}> : () -> ()
    %cst_30 = arith.constant dense<0.000000e+00> : vector<2x16x8xf32>
    %89 = tpu.matmul %88, %76, %cst_30 {dimension_numbers = #tpu.dot_dimension_numbers<[2], [1], [1], [2], [0, 0, 0, 1, 1, 2], [0], [0]>} : vector<2x16x16xf32>, vector<2x16x8xf32>, vector<2x16x8xf32> -> vector<2x16x8xf32>
    "tpu.trace_stop"() : () -> ()
    %90 = vector.shape_cast %89 : vector<2x16x8xf32> to vector<32x8xf32>
    %91 = vector.extract_strided_slice %13 {offsets = [8, 0], sizes = [8, 32], strides = [1, 1]} : vector<32x32xf32> to vector<8x32xf32>
    %cst_31 = arith.constant dense<0.000000e+00> : vector<32x32xf32>
    %92 = tpu.matmul %90, %91, %cst_31 {dimension_numbers = #tpu.dot_dimension_numbers<[1], [0], [0], [1], [0, 0, 1, 1], [], []>} : vector<32x8xf32>, vector<8x32xf32>, vector<32x32xf32> -> vector<32x32xf32>
    %93 = arith.addf %70, %92 : vector<32x32xf32>
    %94 = vector.extract_strided_slice %44 {offsets = [0, 16], sizes = [32, 8], strides = [1, 1]} : vector<32x32xf32> to vector<32x8xf32>
    %95 = vector.shape_cast %94 : vector<32x8xf32> to vector<2x16x8xf32>
    %96 = vector.extract_strided_slice %45 {offsets = [0, 16], sizes = [32, 8], strides = [1, 1]} : vector<32x32xf32> to vector<32x8xf32>
    %97 = vector.shape_cast %96 : vector<32x8xf32> to vector<2x16x8xf32>
    %98 = vector.extract_strided_slice %46 {offsets = [0, 16], sizes = [32, 8], strides = [1, 1]} : vector<32x32xf32> to vector<32x8xf32>
    %99 = vector.shape_cast %98 : vector<32x8xf32> to vector<2x16x8xf32>
    "tpu.trace_start"() <{level = 10 : i32, message = "bqd,bkd->bqk"}> : () -> ()
    %cst_32 = arith.constant dense<0.000000e+00> : vector<2x16x16xf32>
    %100 = tpu.matmul %95, %97, %cst_32 {dimension_numbers = #tpu.dot_dimension_numbers<[2], [2], [1], [1], [0, 0, 0, 1, 1, 1], [0], [0]>} : vector<2x16x8xf32>, vector<2x16x8xf32>, vector<2x16x16xf32> -> vector<2x16x16xf32>
    "tpu.trace_stop"() : () -> ()
    %cst_33 = arith.constant 0.353553385 : f32
    %101 = vector.broadcast %cst_33 : f32 to vector<2x16x16xf32>
    %102 = arith.mulf %100, %101 : vector<2x16x16xf32>
    %cst_34 = arith.constant dense<0xFF800000> : vector<2x16xf32>
    %103 = vector.multi_reduction <maximumf>, %102, %cst_34 [2] : vector<2x16x16xf32> to vector<2x16xf32>
    %104 = vector.shape_cast %103 : vector<2x16xf32> to vector<2x16x1xf32>
    %105 = vector.broadcast %104 : vector<2x16x1xf32> to vector<2x16x16xf32>
    %106 = arith.subf %102, %105 : vector<2x16x16xf32>
    %107 = math.exp %106 : vector<2x16x16xf32>
    %cst_35 = arith.constant dense<0.000000e+00> : vector<2x16xf32>
    %108 = vector.multi_reduction <add>, %107, %cst_35 [2] : vector<2x16x16xf32> to vector<2x16xf32>
    %109 = vector.shape_cast %108 : vector<2x16xf32> to vector<2x16x1xf32>
    %110 = vector.broadcast %109 : vector<2x16x1xf32> to vector<2x16x16xf32>
    %111 = arith.divf %107, %110 : vector<2x16x16xf32>
    "tpu.trace_start"() <{level = 10 : i32, message = "bqk,bkd->bqd"}> : () -> ()
    %cst_36 = arith.constant dense<0.000000e+00> : vector<2x16x8xf32>
    %112 = tpu.matmul %111, %99, %cst_36 {dimension_numbers = #tpu.dot_dimension_numbers<[2], [1], [1], [2], [0, 0, 0, 1, 1, 2], [0], [0]>} : vector<2x16x16xf32>, vector<2x16x8xf32>, vector<2x16x8xf32> -> vector<2x16x8xf32>
    "tpu.trace_stop"() : () -> ()
    %113 = vector.shape_cast %112 : vector<2x16x8xf32> to vector<32x8xf32>
    %114 = vector.extract_strided_slice %13 {offsets = [16, 0], sizes = [8, 32], strides = [1, 1]} : vector<32x32xf32> to vector<8x32xf32>
    %cst_37 = arith.constant dense<0.000000e+00> : vector<32x32xf32>
    %115 = tpu.matmul %113, %114, %cst_37 {dimension_numbers = #tpu.dot_dimension_numbers<[1], [0], [0], [1], [0, 0, 1, 1], [], []>} : vector<32x8xf32>, vector<8x32xf32>, vector<32x32xf32> -> vector<32x32xf32>
    %116 = arith.addf %93, %115 : vector<32x32xf32>
    %117 = vector.extract_strided_slice %44 {offsets = [0, 24], sizes = [32, 8], strides = [1, 1]} : vector<32x32xf32> to vector<32x8xf32>
    %118 = vector.shape_cast %117 : vector<32x8xf32> to vector<2x16x8xf32>
    %119 = vector.extract_strided_slice %45 {offsets = [0, 24], sizes = [32, 8], strides = [1, 1]} : vector<32x32xf32> to vector<32x8xf32>
    %120 = vector.shape_cast %119 : vector<32x8xf32> to vector<2x16x8xf32>
    %121 = vector.extract_strided_slice %46 {offsets = [0, 24], sizes = [32, 8], strides = [1, 1]} : vector<32x32xf32> to vector<32x8xf32>
    %122 = vector.shape_cast %121 : vector<32x8xf32> to vector<2x16x8xf32>
    "tpu.trace_start"() <{level = 10 : i32, message = "bqd,bkd->bqk"}> : () -> ()
    %cst_38 = arith.constant dense<0.000000e+00> : vector<2x16x16xf32>
    %123 = tpu.matmul %118, %120, %cst_38 {dimension_numbers = #tpu.dot_dimension_numbers<[2], [2], [1], [1], [0, 0, 0, 1, 1, 1], [0], [0]>} : vector<2x16x8xf32>, vector<2x16x8xf32>, vector<2x16x16xf32> -> vector<2x16x16xf32>
    "tpu.trace_stop"() : () -> ()
    %cst_39 = arith.constant 0.353553385 : f32
    %124 = vector.broadcast %cst_39 : f32 to vector<2x16x16xf32>
    %125 = arith.mulf %123, %124 : vector<2x16x16xf32>
    %cst_40 = arith.constant dense<0xFF800000> : vector<2x16xf32>
    %126 = vector.multi_reduction <maximumf>, %125, %cst_40 [2] : vector<2x16x16xf32> to vector<2x16xf32>
    %127 = vector.shape_cast %126 : vector<2x16xf32> to vector<2x16x1xf32>
    %128 = vector.broadcast %127 : vector<2x16x1xf32> to vector<2x16x16xf32>
    %129 = arith.subf %125, %128 : vector<2x16x16xf32>
    %130 = math.exp %129 : vector<2x16x16xf32>
    %cst_41 = arith.constant dense<0.000000e+00> : vector<2x16xf32>
    %131 = vector.multi_reduction <add>, %130, %cst_41 [2] : vector<2x16x16xf32> to vector<2x16xf32>
    %132 = vector.shape_cast %131 : vector<2x16xf32> to vector<2x16x1xf32>
    %133 = vector.broadcast %132 : vector<2x16x1xf32> to vector<2x16x16xf32>
    %134 = arith.divf %130, %133 : vector<2x16x16xf32>
    "tpu.trace_start"() <{level = 10 : i32, message = "bqk,bkd->bqd"}> : () -> ()
    %cst_42 = arith.constant dense<0.000000e+00> : vector<2x16x8xf32>
    %135 = tpu.matmul %134, %122, %cst_42 {dimension_numbers = #tpu.dot_dimension_numbers<[2], [1], [1], [2], [0, 0, 0, 1, 1, 2], [0], [0]>} : vector<2x16x16xf32>, vector<2x16x8xf32>, vector<2x16x8xf32> -> vector<2x16x8xf32>
    "tpu.trace_stop"() : () -> ()
    %136 = vector.shape_cast %135 : vector<2x16x8xf32> to vector<32x8xf32>
    %137 = vector.extract_strided_slice %13 {offsets = [24, 0], sizes = [8, 32], strides = [1, 1]} : vector<32x32xf32> to vector<8x32xf32>
    %cst_43 = arith.constant dense<0.000000e+00> : vector<32x32xf32>
    %138 = tpu.matmul %136, %137, %cst_43 {dimension_numbers = #tpu.dot_dimension_numbers<[1], [0], [0], [1], [0, 0, 1, 1], [], []>} : vector<32x8xf32>, vector<8x32xf32>, vector<32x32xf32> -> vector<32x32xf32>
    %139 = arith.addf %116, %138 : vector<32x32xf32>
    %c14 = arith.constant 14 : index
    %c0_44 = arith.constant 0 : index
    %140 = vector.load %arg1[%c14, %c0_44] : memref<24x128xf32, #tpu.memory_space<vmem>>, vector<1x32xf32>
    %141 = vector.broadcast %140 : vector<1x32xf32> to vector<32x32xf32>
    %142 = arith.addf %139, %141 : vector<32x32xf32>
    %143 = arith.addf %11, %142 : vector<32x32xf32>
    %c15 = arith.constant 15 : index
    %c0_45 = arith.constant 0 : index
    %144 = vector.load %arg1[%c15, %c0_45] : memref<24x128xf32, #tpu.memory_space<vmem>>, vector<1x32xf32>
    %c16 = arith.constant 16 : index
    %c0_46 = arith.constant 0 : index
    %145 = vector.load %arg1[%c16, %c0_46] : memref<24x128xf32, #tpu.memory_space<vmem>>, vector<1x32xf32>
    %cst_47 = arith.constant dense<0.000000e+00> : vector<32xf32>
    %146 = vector.multi_reduction <add>, %143, %cst_47 [1] : vector<32x32xf32> to vector<32xf32>
    %147 = vector.shape_cast %146 : vector<32xf32> to vector<32x1xf32>
    %cst_48 = arith.constant 3.200000e+01 : f32
    %148 = vector.broadcast %cst_48 : f32 to vector<32x1xf32>
    %149 = arith.divf %147, %148 : vector<32x1xf32>
    %150 = vector.broadcast %149 : vector<32x1xf32> to vector<32x32xf32>
    %151 = arith.subf %143, %150 : vector<32x32xf32>
    %152 = arith.mulf %151, %151 : vector<32x32xf32>
    %cst_49 = arith.constant dense<0.000000e+00> : vector<32xf32>
    %153 = vector.multi_reduction <add>, %152, %cst_49 [1] : vector<32x32xf32> to vector<32xf32>
    %154 = vector.shape_cast %153 : vector<32xf32> to vector<32x1xf32>
    %cst_50 = arith.constant 3.200000e+01 : f32
    %155 = vector.broadcast %cst_50 : f32 to vector<32x1xf32>
    %156 = arith.divf %154, %155 : vector<32x1xf32>
    %157 = vector.broadcast %149 : vector<32x1xf32> to vector<32x32xf32>
    %158 = arith.subf %143, %157 : vector<32x32xf32>
    %cst_51 = arith.constant 9.99999997E-7 : f32
    %159 = vector.broadcast %cst_51 : f32 to vector<32x1xf32>
    %160 = arith.addf %156, %159 : vector<32x1xf32>
    %161 = math.rsqrt %160 : vector<32x1xf32>
    %162 = vector.broadcast %161 : vector<32x1xf32> to vector<32x32xf32>
    %163 = arith.mulf %158, %162 : vector<32x32xf32>
    %164 = vector.broadcast %144 : vector<1x32xf32> to vector<32x32xf32>
    %165 = arith.mulf %163, %164 : vector<32x32xf32>
    %166 = vector.broadcast %145 : vector<1x32xf32> to vector<32x32xf32>
    %167 = arith.addf %165, %166 : vector<32x32xf32>
    %cst_52 = arith.constant dense<0.000000e+00> : vector<32x64xf32>
    %168 = tpu.matmul %167, %14, %cst_52 {dimension_numbers = #tpu.dot_dimension_numbers<[1], [0], [0], [1], [0, 0, 1, 1], [], []>} : vector<32x32xf32>, vector<32x64xf32>, vector<32x64xf32> -> vector<32x64xf32>
    %c17 = arith.constant 17 : index
    %c0_53 = arith.constant 0 : index
    %169 = vector.load %arg1[%c17, %c0_53] : memref<24x128xf32, #tpu.memory_space<vmem>>, vector<1x64xf32>
    %170 = vector.broadcast %169 : vector<1x64xf32> to vector<32x64xf32>
    %171 = arith.addf %168, %170 : vector<32x64xf32>
    %cst_54 = arith.constant 5.000000e-01 : f32
    %172 = vector.broadcast %cst_54 : f32 to vector<32x64xf32>
    %173 = arith.mulf %172, %171 : vector<32x64xf32>
    %cst_55 = arith.constant 4.471500e-02 : f32
    %174 = vector.broadcast %cst_55 : f32 to vector<32x64xf32>
    %175 = arith.mulf %174, %171 : vector<32x64xf32>
    %176 = arith.mulf %175, %171 : vector<32x64xf32>
    %177 = arith.mulf %176, %171 : vector<32x64xf32>
    %178 = arith.addf %171, %177 : vector<32x64xf32>
    %cst_56 = arith.constant 0.797884583 : f32
    %179 = vector.broadcast %cst_56 : f32 to vector<32x64xf32>
    %180 = arith.mulf %179, %178 : vector<32x64xf32>
    %181 = math.tanh %180 : vector<32x64xf32>
    %cst_57 = arith.constant 1.000000e+00 : f32
    %182 = vector.broadcast %cst_57 : f32 to vector<32x64xf32>
    %183 = arith.addf %182, %181 : vector<32x64xf32>
    %184 = arith.mulf %173, %183 : vector<32x64xf32>
    %cst_58 = arith.constant dense<0.000000e+00> : vector<32x32xf32>
    %185 = tpu.matmul %184, %15, %cst_58 {dimension_numbers = #tpu.dot_dimension_numbers<[1], [0], [0], [1], [0, 0, 1, 1], [], []>} : vector<32x64xf32>, vector<64x32xf32>, vector<32x32xf32> -> vector<32x32xf32>
    %c18 = arith.constant 18 : index
    %c0_59 = arith.constant 0 : index
    %186 = vector.load %arg1[%c18, %c0_59] : memref<24x128xf32, #tpu.memory_space<vmem>>, vector<1x32xf32>
    %187 = vector.broadcast %186 : vector<1x32xf32> to vector<32x32xf32>
    %188 = arith.addf %185, %187 : vector<32x32xf32>
    %189 = arith.addf %143, %188 : vector<32x32xf32>
    %c1 = arith.constant 1 : index
    %c0_60 = arith.constant 0 : index
    %190 = vector.load %arg1[%c1, %c0_60] : memref<24x128xf32, #tpu.memory_space<vmem>>, vector<1x32xf32>
    %c2 = arith.constant 2 : index
    %c0_61 = arith.constant 0 : index
    %191 = vector.load %arg1[%c2, %c0_61] : memref<24x128xf32, #tpu.memory_space<vmem>>, vector<1x32xf32>
    %cst_62 = arith.constant dense<0.000000e+00> : vector<32xf32>
    %192 = vector.multi_reduction <add>, %189, %cst_62 [1] : vector<32x32xf32> to vector<32xf32>
    %193 = vector.shape_cast %192 : vector<32xf32> to vector<32x1xf32>
    %cst_63 = arith.constant 3.200000e+01 : f32
    %194 = vector.broadcast %cst_63 : f32 to vector<32x1xf32>
    %195 = arith.divf %193, %194 : vector<32x1xf32>
    %196 = vector.broadcast %195 : vector<32x1xf32> to vector<32x32xf32>
    %197 = arith.subf %189, %196 : vector<32x32xf32>
    %198 = arith.mulf %197, %197 : vector<32x32xf32>
    %cst_64 = arith.constant dense<0.000000e+00> : vector<32xf32>
    %199 = vector.multi_reduction <add>, %198, %cst_64 [1] : vector<32x32xf32> to vector<32xf32>
    %200 = vector.shape_cast %199 : vector<32xf32> to vector<32x1xf32>
    %cst_65 = arith.constant 3.200000e+01 : f32
    %201 = vector.broadcast %cst_65 : f32 to vector<32x1xf32>
    %202 = arith.divf %200, %201 : vector<32x1xf32>
    %203 = vector.broadcast %195 : vector<32x1xf32> to vector<32x32xf32>
    %204 = arith.subf %189, %203 : vector<32x32xf32>
    %cst_66 = arith.constant 9.99999997E-7 : f32
    %205 = vector.broadcast %cst_66 : f32 to vector<32x1xf32>
    %206 = arith.addf %202, %205 : vector<32x1xf32>
    %207 = math.rsqrt %206 : vector<32x1xf32>
    %208 = vector.broadcast %207 : vector<32x1xf32> to vector<32x32xf32>
    %209 = arith.mulf %204, %208 : vector<32x32xf32>
    %210 = vector.broadcast %190 : vector<1x32xf32> to vector<32x32xf32>
    %211 = arith.mulf %209, %210 : vector<32x32xf32>
    %212 = vector.broadcast %191 : vector<1x32xf32> to vector<32x32xf32>
    %213 = arith.addf %211, %212 : vector<32x32xf32>
    %c0_67 = arith.constant 0 : index
    %c0_68 = arith.constant 0 : index
    %214 = vector.load %arg3[%c0_67, %c0_68] : memref<32x32xf32, #tpu.memory_space<vmem>>, vector<32x32xf32>
    tpu.vector_store %arg3[%c0_67, %c0_68], %213 {strides = array<i32>} : memref<32x32xf32, #tpu.memory_space<vmem>>, vector<32x32xf32>,
    return
  }
}

</mosaic_0001>

<llo_original>
// kernel: siglip_vision_forward.1
$region0: #{siglip_vision_forward.1}
  #allocation0 [shape = 'u32[]', space=smem, size = 0x4, offset = 0x4, fixed_abs, tag = 'smem constant byte address 0x4 - core index']
  #allocation1 [shape = 'u32[72,128]{1,0:T(1,128)}', space=vmem, size = 0x9000, scoped, tag = 'internal scratch']
  %s0 = inlined_call_operand.vmem [shape: f32[32,48], index: 0, kind: input, shape index: {}]
  %s1 = inlined_call_operand.vmem [shape: f32[24,128], index: 1, kind: input, shape index: {}]
  %s2 = inlined_call_operand.vmem [shape: f32[384,128], index: 2, kind: input, shape index: {}]
  %s3 = inlined_call_operand.hbm [shape: f32[32,32], index: 3, kind: output, shape index: {}]
  %s4 = sld [smem:[#allocation0]]
  $region22: #{siglip_vision_forward.1} parent=0
    _
  %s6 = ssub.s32 1, %s4
  %s7 = scalar_select 0, %s6, %s4
  $region1: #{siglip_vision_forward.1} parent=0
    #allocation2 [shape = 'u8[16384]{0}', space=vmem, size = 0x4000, scoped, tag = 'output window, operand 0, single buffered']
    #allocation3 [shape = 's32[1]{0}', space=sflag, size = 0x4, scoped, tag = 'scoped memory for siglip_vision_forward.1']
    %8 = vsyncpa [#allocation3], 0
    // Predicated region
    $region2: #{siglip_vision_forward.1} parent=1 // pred_check
      _
    $region3: #{siglip_vision_forward.1} parent=1 // pred_check_branch
      %10 = sbr.rel (0) target = $region5
    $region4: #{siglip_vision_forward.1} parent=1 // pred_region
      _
    $region5: #{siglip_vision_forward.1} parent=1 // pred_fallthru
      _
    // Predicated region
    $region6: #{siglip_vision_forward.1} parent=1 // pred_check
      _
    $region7: #{siglip_vision_forward.1} parent=1 // pred_check_branch
      %12 = sbr.rel (0) target = $region9
    $region8: #{siglip_vision_forward.1} parent=1 // pred_region
      _
    $region9: #{siglip_vision_forward.1} parent=1 // pred_fallthru
      _
    // Predicated region
    $region10: #{siglip_vision_forward.1} parent=1 // pred_check
      _
    $region11: #{siglip_vision_forward.1} parent=1 // pred_check_branch
      %14 = sbr.rel (0) target = $region13
    $region12: #{siglip_vision_forward.1} parent=1 // pred_region
      _
    $region13: #{siglip_vision_forward.1} parent=1 // pred_fallthru
      _
    %v15 = vld [vmem:[%s2] sm:$0xff]
    %v16 = vld [vmem:[%s2 + $0x8] sm:$0xff]
    %v17 = vld [vmem:[%s2 + $0x10] sm:$0xff]
    %v18 = vld [vmem:[%s2 + $0x18] sm:$0xff]
    %v19 = vld [vmem:[%s2 + $0x20] sm:$0xff]
    %v20 = vld [vmem:[%s2 + $0x28] sm:$0xff]
    %v21 = vld [vmem:[%s0] sm:$0xff]
    %v22 = vld [vmem:[%s0 + $0x8] sm:$0xff]
    %v23 = vld [vmem:[%s0 + $0x10] sm:$0xff]
    %v24 = vld [vmem:[%s0 + $0x18] sm:$0xff]
    %v25 = vld [vmem:[%s1] sm:$0x1]
    %v26 = vperm.slane %v25, 0
    %vm27 = vcmask 392192
    %v29 = vsel %vm27, %v21, 0
    %v32 = vsel %vm27, %v22, 0
    %v35 = vsel %vm27, %v23, 0
    %v38 = vsel %vm27, %v24, 0
    %40 = vmatpush.msra.mxu0 0.0
    %41 = vmatpush.msra.mxu0 0.0
    %42 = vmatpush.msra.mxu0 0.0
    %43 = vmatpush.msra.mxu0 0.0
    %44 = vmatpush.msra.mxu0 0.0
    %45 = vmatpush.msra.mxu0 0.0
    %46 = vmatpush.msra.mxu0 0.0
    %47 = vmatpush.msra.mxu0 0.0
    %48 = vmatpush.msra.mxu0 0.0
    %49 = vmatpush.msra.mxu0 0.0
    %50 = vmatpush.msra.mxu0 %v20
    %51 = vmatpush.msra.mxu0 %v19
    %52 = vmatpush.msra.mxu0 %v18
    %53 = vmatpush.msra.mxu0 %v17
    %54 = vmatpush.msra.mxu0 %v16
    %55 = vmatpush.msra.mxu0 %v15
    %56 = vmatmul.f32.gmra.mxu0 %v29
    %v57 = vpop.f32.mrf.mxu0
    %v58 = vadd.f32 %v26, %v57
    %59 = vmatmul.f32.gmra.mxu0 %v32
    %v60 = vpop.f32.mrf.mxu0
    %v61 = vadd.f32 %v26, %v60
    %62 = vmatmul.f32.gmra.mxu0 %v35
    %v63 = vpop.f32.mrf.mxu0
    %v64 = vadd.f32 %v26, %v63
    %65 = vmatmul.f32.gmra.mxu0 %v38
    %v66 = vpop.f32.mrf.mxu0
    %v67 = vadd.f32 %v26, %v66
    %68 = vdwg.mxu0
    %v69 = vld [vmem:[%s2 + $0x170] sm:$0xff]
    %v70 = vld [vmem:[%s2 + $0x178] sm:$0xff]
    %v71 = vadd.f32 %v58, %v69
    %v72 = vadd.f32 %v61, %v70
    %v73 = vadd.f32 %v64, %v69
    %v74 = vadd.f32 %v67, %v70
    %v75 = vld [vmem:[%s2 + $0xd0] sm:$0xff]
    %v76 = vld [vmem:[%s2 + $0xd8] sm:$0xff]
    %v77 = vld [vmem:[%s2 + $0xe0] sm:$0xff]
    %v78 = vld [vmem:[%s2 + $0xe8] sm:$0xff]
    %v79 = vld [vmem:[%s2 + $0xf0] sm:$0xff]
    %v80 = vld [vmem:[%s2 + $0xf8] sm:$0xff]
    %v81 = vld [vmem:[%s2 + $0x100] sm:$0xff]
    %v82 = vld [vmem:[%s2 + $0x108] sm:$0xff]
    %v83 = vld [vmem:[%s2 + $0x110] sm:$0xff]
    %v84 = vld [vmem:[%s2 + $0x118] sm:$0xff]
    %v85 = vld [vmem:[%s2 + $0x120] sm:$0xff]
    %v86 = vld [vmem:[%s2 + $0x128] sm:$0xff]
    %v87 = vld [vmem:[%s2 + $0x130] sm:$0xff]
    %v88 = vld [vmem:[%s2 + $0x138] sm:$0xff]
    %v89 = vld [vmem:[%s2 + $0x140] sm:$0xff]
    %v90 = vld [vmem:[%s2 + $0x148] sm:$0xff]
    %v91 = vld [vmem:[%s2 + $0x150] sm:$0xff]
    %v92 = vld [vmem:[%s2 + $0x158] sm:$0xff]
    %v93 = vld [vmem:[%s2 + $0x160] sm:$0xff]
    %v94 = vld [vmem:[%s2 + $0x168] sm:$0xff]
    %v95 = vld [vmem:[%s1 + $0xb] sm:$0x1]
    %v96 = vld [vmem:[%s1 + $0xc] sm:$0x1]
    %vm97 = vcmask 261120
    %v98 = vsel %vm97, %v71, 0.0
    %99 = vadd.xlane.f32.xlu0 %v98
    %v100 = vpop.xlane.xlu0 %99
    %v101 = vsel %vm97, %v72, 0.0
    %102 = vadd.xlane.f32.xlu0 %v101
    %v103 = vpop.xlane.xlu0 %102
    %v104 = vsel %vm97, %v73, 0.0
    %105 = vadd.xlane.f32.xlu0 %v104
    %v106 = vpop.xlane.xlu0 %105
    %v107 = vsel %vm97, %v74, 0.0
    %108 = vadd.xlane.f32.xlu0 %v107
    %v109 = vpop.xlane.xlu0 %108
    %v110 = vrcp.pop 32.0
    %v111 = vmul.f32 32.0, %v110
    %v112 = vsub.f32 1.0, %v111
    %v113 = vmul.f32 %v110, %v112
    %v114 = vadd.f32 %v110, %v113
    %vm115 = vweird.f32 %v110
    %v116 = vsel %vm115, %v110, %v114
    %v117 = vmul.f32 %v100, %v116
    %v118 = vmul.f32 %v103, %v116
    %v119 = vmul.f32 %v106, %v116
    %v120 = vmul.f32 %v109, %v116
    %v121 = vsub.f32 %v71, %v117
    %v122 = vsub.f32 %v72, %v118
    %v123 = vsub.f32 %v73, %v119
    %v124 = vsub.f32 %v74, %v120
    %v125 = vmul.f32 %v121, %v121
    %v126 = vmul.f32 %v122, %v122
    %v127 = vmul.f32 %v123, %v123
    %v128 = vmul.f32 %v124, %v124
    %v129 = vsel %vm97, %v125, 0.0
    %130 = vadd.xlane.f32.xlu0 %v129
    %v131 = vpop.xlane.xlu0 %130
    %v132 = vsel %vm97, %v126, 0.0
    %133 = vadd.xlane.f32.xlu0 %v132
    %v134 = vpop.xlane.xlu0 %133
    %v135 = vsel %vm97, %v127, 0.0
    %136 = vadd.xlane.f32.xlu0 %v135
    %v137 = vpop.xlane.xlu0 %136
    %v138 = vsel %vm97, %v128, 0.0
    %139 = vadd.xlane.f32.xlu0 %v138
    %v140 = vpop.xlane.xlu0 %139
    %v141 = vmul.f32 %v131, %v116
    %v142 = vmul.f32 %v134, %v116
    %v143 = vmul.f32 %v137, %v116
    %v144 = vmul.f32 %v140, %v116
    %v145 = vadd.f32 %v141, 1e-06
    %v146 = vadd.f32 %v142, 1e-06
    %v147 = vadd.f32 %v143, 1e-06
    %v148 = vadd.f32 %v144, 1e-06
    %v149 = vrsqrt.pop %v145
    %v150 = vmul.f32 %v149, %v145
    %v151 = vmul.f32 %v150, %v149
    %v152 = vmul.f32 0.5, %v151
    %v153 = vsub.f32 1.5, %v152
    %v154 = vmul.f32 %v149, %v153
    %vm155 = vweird.f32 %v145
    %vm156 = vweird.f32 %v149
    %vm157 = vmor %vm155, %vm156
    %v158 = vsel %vm157, %v149, %v154
    %v159 = vrsqrt.pop %v146
    %v160 = vmul.f32 %v159, %v146
    %v161 = vmul.f32 %v160, %v159
    %v162 = vmul.f32 0.5, %v161
    %v163 = vsub.f32 1.5, %v162
    %v164 = vmul.f32 %v159, %v163
    %vm165 = vweird.f32 %v146
    %vm166 = vweird.f32 %v159
    %vm167 = vmor %vm165, %vm166
    %v168 = vsel %vm167, %v159, %v164
    %v169 = vrsqrt.pop %v147
    %v170 = vmul.f32 %v169, %v147
    %v171 = vmul.f32 %v170, %v169
    %v172 = vmul.f32 0.5, %v171
    %v173 = vsub.f32 1.5, %v172
    %v174 = vmul.f32 %v169, %v173
    %vm175 = vweird.f32 %v147
    %vm176 = vweird.f32 %v169
    %vm177 = vmor %vm175, %vm176
    %v178 = vsel %vm177, %v169, %v174
    %v179 = vrsqrt.pop %v148
    %v180 = vmul.f32 %v179, %v148
    %v181 = vmul.f32 %v180, %v179
    %v182 = vmul.f32 0.5, %v181
    %v183 = vsub.f32 1.5, %v182
    %v184 = vmul.f32 %v179, %v183
    %vm185 = vweird.f32 %v148
    %vm186 = vweird.f32 %v179
    %vm187 = vmor %vm185, %vm186
    %v188 = vsel %vm187, %v179, %v184
    %v189 = vmul.f32 %v121, %v158
    %v190 = vmul.f32 %v122, %v168
    %v191 = vmul.f32 %v123, %v178
    %v192 = vmul.f32 %v124, %v188
    %v193 = vperm.slane %v95, 0
    %v194 = vmul.f32 %v189, %v193
    %v195 = vmul.f32 %v190, %v193
    %v196 = vmul.f32 %v191, %v193
    %v197 = vmul.f32 %v192, %v193
    %v198 = vperm.slane %v96, 0
    %v199 = vadd.f32 %v194, %v198
    %v200 = vadd.f32 %v195, %v198
    %v201 = vadd.f32 %v196, %v198
    %v202 = vadd.f32 %v197, %v198
    %v203 = vld [vmem:[%s1 + $0xd] sm:$0x1]
    %v204 = vperm.slane %v203, 0
    %v206 = vsel %vm97, %v199, 0
    %v209 = vsel %vm97, %v200, 0
    %v212 = vsel %vm97, %v201, 0
    %v215 = vsel %vm97, %v202, 0
    %217 = vmatpush.msra.mxu0 0.0
    %218 = vmatpush.msra.mxu0 0.0
    %219 = vmatpush.msra.mxu0 0.0
    %220 = vmatpush.msra.mxu0 0.0
    %221 = vmatpush.msra.mxu0 0.0
    %222 = vmatpush.msra.mxu0 0.0
    %223 = vmatpush.msra.mxu0 0.0
    %224 = vmatpush.msra.mxu0 0.0
    %225 = vmatpush.msra.mxu0 0.0
    %226 = vmatpush.msra.mxu0 0.0
    %227 = vmatpush.msra.mxu0 0.0
    %228 = vmatpush.msra.mxu0 0.0
    %229 = vmatpush.msra.mxu0 %v78
    %230 = vmatpush.msra.mxu0 %v77
    %231 = vmatpush.msra.mxu0 %v76
    %232 = vmatpush.msra.mxu0 %v75
    %233 = vmatmul.f32.gmra.mxu0 %v206
    %v234 = vpop.f32.mrf.mxu0
    %v235 = vadd.f32 %v204, %v234
    %236 = vmatmul.f32.gmra.mxu0 %v209
    %v237 = vpop.f32.mrf.mxu0
    %v238 = vadd.f32 %v204, %v237
    %239 = vmatmul.f32.gmra.mxu0 %v212
    %v240 = vpop.f32.mrf.mxu0
    %v241 = vadd.f32 %v204, %v240
    %242 = vmatmul.f32.gmra.mxu0 %v215
    %v243 = vpop.f32.mrf.mxu0
    %v244 = vadd.f32 %v204, %v243
    %245 = vdwg.mxu0
    %248 = vrot.lane.b32.xlu0 %v235, 96
    %v249 = vpop.permute.xlu0 %248
    %250 = vrot.lane.b32.xlu0 %v238, 96
    %v251 = vpop.permute.xlu0 %250
    %vm252 = vcmask 64512
    %v253 = vsel %vm252, %v235, 0
    %v255 = vsel %vm252, %v238, 0
    %v257 = vsel %vm252, %v249, 0
    %v259 = vsel %vm252, %v251, 0
    %261 = vmatpush.xpose.msra.mxu0 0.0
    %262 = vmatpush.xpose.msra.mxu0 0.0
    %263 = vmatpush.xpose.msra.mxu0 0.0
    %264 = vmatpush.xpose.msra.mxu0 0.0
    %265 = vmatpush.xpose.msra.mxu0 0.0
    %266 = vmatpush.xpose.msra.mxu0 0.0
    %267 = vmatpush.xpose.msra.mxu0 0.0
    %268 = vmatpush.xpose.msra.mxu0 0.0
    %269 = vmatpush.xpose.msra.mxu0 0.0
    %270 = vmatpush.xpose.msra.mxu0 0.0
    %271 = vmatpush.xpose.msra.mxu0 0.0
    %272 = vmatpush.xpose.msra.mxu0 0.0
    %273 = vmatpush.xpose.msra.mxu0 0.0
    %274 = vmatpush.xpose.msra.mxu0 0.0
    %275 = vmatpush.xpose.msra.mxu0 %v259
    %276 = vmatpush.xpose.msra.mxu0 %v257
    %277 = vmatmul.f32.gmra.mxu0 %v253
    %v278 = vpop.f32.mrf.mxu0
    %v279 = vadd.f32 0.0, %v278
    %280 = vmatmul.f32.gmra.mxu0 %v255
    %v281 = vpop.f32.mrf.mxu0
    %v282 = vadd.f32 0.0, %v281
    %283 = vdwg.mxu0
    %286 = vrot.lane.b32.xlu0 %v241, 96
    %v287 = vpop.permute.xlu0 %286
    %288 = vrot.lane.b32.xlu0 %v244, 96
    %v289 = vpop.permute.xlu0 %288
    %v290 = vsel %vm252, %v241, 0
    %v292 = vsel %vm252, %v244, 0
    %v294 = vsel %vm252, %v287, 0
    %v296 = vsel %vm252, %v289, 0
    %298 = vmatpush.xpose.msra.mxu0 0.0
    %299 = vmatpush.xpose.msra.mxu0 0.0
    %300 = vmatpush.xpose.msra.mxu0 0.0
    %301 = vmatpush.xpose.msra.mxu0 0.0
    %302 = vmatpush.xpose.msra.mxu0 0.0
    %303 = vmatpush.xpose.msra.mxu0 0.0
    %304 = vmatpush.xpose.msra.mxu0 0.0
    %305 = vmatpush.xpose.msra.mxu0 0.0
    %306 = vmatpush.xpose.msra.mxu0 0.0
    %307 = vmatpush.xpose.msra.mxu0 0.0
    %308 = vmatpush.xpose.msra.mxu0 0.0
    %309 = vmatpush.xpose.msra.mxu0 0.0
    %310 = vmatpush.xpose.msra.mxu0 0.0
    %311 = vmatpush.xpose.msra.mxu0 0.0
    %312 = vmatpush.xpose.msra.mxu0 %v296
    %313 = vmatpush.xpose.msra.mxu0 %v294
    %314 = vmatmul.f32.gmra.mxu0 %v290
    %v315 = vpop.f32.mrf.mxu0
    %v316 = vadd.f32 0.0, %v315
    %317 = vmatmul.f32.gmra.mxu0 %v292
    %v318 = vpop.f32.mrf.mxu0
    %v319 = vadd.f32 0.0, %v318
    %320 = vdwg.mxu0
    %v321 = vmul.f32 %v279, 0.35355338
    %v322 = vmul.f32 %v282, 0.35355338
    %v323 = vmul.f32 %v316, 0.35355338
    %v324 = vmul.f32 %v319, 0.35355338
    %vm325 = vcmask 130048
    %v326 = vsel %vm325, %v321, -inf
    %327 = vmax.xlane.f32.xlu0 %v326
    %v328 = vpop.xlane.xlu0 %327
    %v329 = vsel %vm325, %v322, -inf
    %330 = vmax.xlane.f32.xlu0 %v329
    %v331 = vpop.xlane.xlu0 %330
    %v332 = vsel %vm325, %v323, -inf
    %333 = vmax.xlane.f32.xlu0 %v332
    %v334 = vpop.xlane.xlu0 %333
    %v335 = vsel %vm325, %v324, -inf
    %336 = vmax.xlane.f32.xlu0 %v335
    %v337 = vpop.xlane.xlu0 %336
    %v338 = vsub.f32 %v321, %v328
    %v339 = vsub.f32 %v322, %v331
    %v340 = vsub.f32 %v323, %v334
    %v341 = vsub.f32 %v324, %v337
    %v342 = vmul.f32 %v338, 1.442695
    %v343 = vpow.pop %v342
    %v344 = vmul.f32 %v339, 1.442695
    %v345 = vpow.pop %v344
    %v346 = vmul.f32 %v340, 1.442695
    %v347 = vpow.pop %v346
    %v348 = vmul.f32 %v341, 1.442695
    %v349 = vpow.pop %v348
    %v350 = vsel %vm325, %v343, 0.0
    %351 = vadd.xlane.f32.xlu0 %v350
    %v352 = vpop.xlane.xlu0 %351
    %v353 = vsel %vm325, %v345, 0.0
    %354 = vadd.xlane.f32.xlu0 %v353
    %v355 = vpop.xlane.xlu0 %354
    %v356 = vsel %vm325, %v347, 0.0
    %357 = vadd.xlane.f32.xlu0 %v356
    %v358 = vpop.xlane.xlu0 %357
    %v359 = vsel %vm325, %v349, 0.0
    %360 = vadd.xlane.f32.xlu0 %v359
    %v361 = vpop.xlane.xlu0 %360
    %v362 = vrcp.pop %v352
    %v363 = vmul.f32 %v352, %v362
    %v364 = vsub.f32 1.0, %v363
    %v365 = vmul.f32 %v362, %v364
    %v366 = vadd.f32 %v362, %v365
    %vm367 = vweird.f32 %v352
    %vm368 = vweird.f32 %v362
    %vm369 = vmor %vm367, %vm368
    %v370 = vsel %vm369, %v362, %v366
    %v371 = vand.u32 2147483647, %v352
    %vm372 = vcmp.eq.f32.partialorder %v371, 8.507059e+37
    %v373 = vand.u32 %v352, 2147483648
    %v374 = vor.u32 1.1754944e-38, %v373
    %v375 = vsel %vm372, %v374, %v370
    %v376 = vmul.f32 %v343, %v375
    %v377 = vrcp.pop %v355
    %v378 = vmul.f32 %v355, %v377
    %v379 = vsub.f32 1.0, %v378
    %v380 = vmul.f32 %v377, %v379
    %v381 = vadd.f32 %v377, %v380
    %vm382 = vweird.f32 %v355
    %vm383 = vweird.f32 %v377
    %vm384 = vmor %vm382, %vm383
    %v385 = vsel %vm384, %v377, %v381
    %v386 = vand.u32 2147483647, %v355
    %vm387 = vcmp.eq.f32.partialorder %v386, 8.507059e+37
    %v388 = vand.u32 %v355, 2147483648
    %v389 = vor.u32 1.1754944e-38, %v388
    %v390 = vsel %vm387, %v389, %v385
    %v391 = vmul.f32 %v345, %v390
    %v392 = vrcp.pop %v358
    %v393 = vmul.f32 %v358, %v392
    %v394 = vsub.f32 1.0, %v393
    %v395 = vmul.f32 %v392, %v394
    %v396 = vadd.f32 %v392, %v395
    %vm397 = vweird.f32 %v358
    %vm398 = vweird.f32 %v392
    %vm399 = vmor %vm397, %vm398
    %v400 = vsel %vm399, %v392, %v396
    %v401 = vand.u32 2147483647, %v358
    %vm402 = vcmp.eq.f32.partialorder %v401, 8.507059e+37
    %v403 = vand.u32 %v358, 2147483648
    %v404 = vor.u32 1.1754944e-38, %v403
    %v405 = vsel %vm402, %v404, %v400
    %v406 = vmul.f32 %v347, %v405
    %v407 = vrcp.pop %v361
    %v408 = vmul.f32 %v361, %v407
    %v409 = vsub.f32 1.0, %v408
    %v410 = vmul.f32 %v407, %v409
    %v411 = vadd.f32 %v407, %v410
    %vm412 = vweird.f32 %v361
    %vm413 = vweird.f32 %v407
    %vm414 = vmor %vm412, %vm413
    %v415 = vsel %vm414, %v407, %v411
    %v416 = vand.u32 2147483647, %v361
    %vm417 = vcmp.eq.f32.partialorder %v416, 8.507059e+37
    %v418 = vand.u32 %v361, 2147483648
    %v419 = vor.u32 1.1754944e-38, %v418
    %v420 = vsel %vm417, %v419, %v415
    %v421 = vmul.f32 %v349, %v420
    %422 = vrot.lane.b32.xlu0 %v235, 64
    %v423 = vpop.permute.xlu0 %422
    %424 = vrot.lane.b32.xlu0 %v238, 64
    %v425 = vpop.permute.xlu0 %424
    %v429 = vsel %vm325, %v376, 0
    %v432 = vsel %vm325, %v391, 0
    %434 = vmatpush.msra.mxu0 0.0
    %435 = vmatpush.msra.mxu0 0.0
    %436 = vmatpush.msra.mxu0 0.0
    %437 = vmatpush.msra.mxu0 0.0
    %438 = vmatpush.msra.mxu0 0.0
    %439 = vmatpush.msra.mxu0 0.0
    %440 = vmatpush.msra.mxu0 0.0
    %441 = vmatpush.msra.mxu0 0.0
    %442 = vmatpush.msra.mxu0 0.0
    %443 = vmatpush.msra.mxu0 0.0
    %444 = vmatpush.msra.mxu0 0.0
    %445 = vmatpush.msra.mxu0 0.0
    %446 = vmatpush.msra.mxu0 0.0
    %447 = vmatpush.msra.mxu0 0.0
    %448 = vmatpush.msra.mxu0 %v425
    %449 = vmatpush.msra.mxu0 %v423
    %450 = vmatmul.f32.gmra.mxu0 %v429
    %v451 = vpop.f32.mrf.mxu0
    %v452 = vadd.f32 0.0, %v451
    %453 = vmatmul.f32.gmra.mxu0 %v432
    %v454 = vpop.f32.mrf.mxu0
    %v455 = vadd.f32 0.0, %v454
    %456 = vdwg.mxu0
    %457 = vrot.lane.b32.xlu0 %v241, 64
    %v458 = vpop.permute.xlu0 %457
    %459 = vrot.lane.b32.xlu0 %v244, 64
    %v460 = vpop.permute.xlu0 %459
    %v464 = vsel %vm325, %v406, 0
    %v467 = vsel %vm325, %v421, 0
    %469 = vmatpush.msra.mxu0 0.0
    %470 = vmatpush.msra.mxu0 0.0
    %471 = vmatpush.msra.mxu0 0.0
    %472 = vmatpush.msra.mxu0 0.0
    %473 = vmatpush.msra.mxu0 0.0
    %474 = vmatpush.msra.mxu0 0.0
    %475 = vmatpush.msra.mxu0 0.0
    %476 = vmatpush.msra.mxu0 0.0
    %477 = vmatpush.msra.mxu0 0.0
    %478 = vmatpush.msra.mxu0 0.0
    %479 = vmatpush.msra.mxu0 0.0
    %480 = vmatpush.msra.mxu0 0.0
    %481 = vmatpush.msra.mxu0 0.0
    %482 = vmatpush.msra.mxu0 0.0
    %483 = vmatpush.msra.mxu0 %v460
    %484 = vmatpush.msra.mxu0 %v458
    %485 = vmatmul.f32.gmra.mxu0 %v464
    %v486 = vpop.f32.mrf.mxu0
    %v487 = vadd.f32 0.0, %v486
    %488 = vmatmul.f32.gmra.mxu0 %v467
    %v489 = vpop.f32.mrf.mxu0
    %v490 = vadd.f32 0.0, %v489
    %491 = vdwg.mxu0
    %492 = vrot.lane.b32.xlu0 %v235, 120
    %v493 = vpop.permute.xlu0 %492
    %494 = vrot.lane.b32.xlu0 %v238, 120
    %v495 = vpop.permute.xlu0 %494
    %496 = vrot.lane.b32.xlu0 %v235, 88
    %v497 = vpop.permute.xlu0 %496
    %498 = vrot.lane.b32.xlu0 %v238, 88
    %v499 = vpop.permute.xlu0 %498
    %v500 = vsel %vm252, %v493, 0
    %v502 = vsel %vm252, %v495, 0
    %v504 = vsel %vm252, %v497, 0
    %v506 = vsel %vm252, %v499, 0
    %508 = vmatpush.xpose.msra.mxu0 0.0
    %509 = vmatpush.xpose.msra.mxu0 0.0
    %510 = vmatpush.xpose.msra.mxu0 0.0
    %511 = vmatpush.xpose.msra.mxu0 0.0
    %512 = vmatpush.xpose.msra.mxu0 0.0
    %513 = vmatpush.xpose.msra.mxu0 0.0
    %514 = vmatpush.xpose.msra.mxu0 0.0
    %515 = vmatpush.xpose.msra.mxu0 0.0
    %516 = vmatpush.xpose.msra.mxu0 0.0
    %517 = vmatpush.xpose.msra.mxu0 0.0
    %518 = vmatpush.xpose.msra.mxu0 0.0
    %519 = vmatpush.xpose.msra.mxu0 0.0
    %520 = vmatpush.xpose.msra.mxu0 0.0
    %521 = vmatpush.xpose.msra.mxu0 0.0
    %522 = vmatpush.xpose.msra.mxu0 %v506
    %523 = vmatpush.xpose.msra.mxu0 %v504
    %524 = vmatmul.f32.gmra.mxu0 %v500
    %v525 = vpop.f32.mrf.mxu0
    %v526 = vadd.f32 0.0, %v525
    %527 = vmatmul.f32.gmra.mxu0 %v502
    %v528 = vpop.f32.mrf.mxu0
    %v529 = vadd.f32 0.0, %v528
    %530 = vdwg.mxu0
    %531 = vrot.lane.b32.xlu0 %v241, 120
    %v532 = vpop.permute.xlu0 %531
    %533 = vrot.lane.b32.xlu0 %v244, 120
    %v534 = vpop.permute.xlu0 %533
    %535 = vrot.lane.b32.xlu0 %v241, 88
    %v536 = vpop.permute.xlu0 %535
    %537 = vrot.lane.b32.xlu0 %v244, 88
    %v538 = vpop.permute.xlu0 %537
    %v539 = vsel %vm252, %v532, 0
    %v541 = vsel %vm252, %v534, 0
    %v543 = vsel %vm252, %v536, 0
    %v545 = vsel %vm252, %v538, 0
    %547 = vmatpush.xpose.msra.mxu0 0.0
    %548 = vmatpush.xpose.msra.mxu0 0.0
    %549 = vmatpush.xpose.msra.mxu0 0.0
    %550 = vmatpush.xpose.msra.mxu0 0.0
    %551 = vmatpush.xpose.msra.mxu0 0.0
    %552 = vmatpush.xpose.msra.mxu0 0.0
    %553 = vmatpush.xpose.msra.mxu0 0.0
    %554 = vmatpush.xpose.msra.mxu0 0.0
    %555 = vmatpush.xpose.msra.mxu0 0.0
    %556 = vmatpush.xpose.msra.mxu0 0.0
    %557 = vmatpush.xpose.msra.mxu0 0.0
    %558 = vmatpush.xpose.msra.mxu0 0.0
    %559 = vmatpush.xpose.msra.mxu0 0.0
    %560 = vmatpush.xpose.msra.mxu0 0.0
    %561 = vmatpush.xpose.msra.mxu0 %v545
    %562 = vmatpush.xpose.msra.mxu0 %v543
    %563 = vmatmul.f32.gmra.mxu0 %v539
    %v564 = vpop.f32.mrf.mxu0
    %v565 = vadd.f32 0.0, %v564
    %566 = vmatmul.f32.gmra.mxu0 %v541
    %v567 = vpop.f32.mrf.mxu0
    %v568 = vadd.f32 0.0, %v567
    %569 = vdwg.mxu0
    %v570 = vmul.f32 %v526, 0.35355338
    %v571 = vmul.f32 %v529, 0.35355338
    %v572 = vmul.f32 %v565, 0.35355338
    %v573 = vmul.f32 %v568, 0.35355338
    %v574 = vsel %vm325, %v570, -inf
    %575 = vmax.xlane.f32.xlu0 %v574
    %v576 = vpop.xlane.xlu0 %575
    %v577 = vsel %vm325, %v571, -inf
    %578 = vmax.xlane.f32.xlu0 %v577
    %v579 = vpop.xlane.xlu0 %578
    %v580 = vsel %vm325, %v572, -inf
    %581 = vmax.xlane.f32.xlu0 %v580
    %v582 = vpop.xlane.xlu0 %581
    %v583 = vsel %vm325, %v573, -inf
    %584 = vmax.xlane.f32.xlu0 %v583
    %v585 = vpop.xlane.xlu0 %584
    %v586 = vsub.f32 %v570, %v576
    %v587 = vsub.f32 %v571, %v579
    %v588 = vsub.f32 %v572, %v582
    %v589 = vsub.f32 %v573, %v585
    %v590 = vmul.f32 %v586, 1.442695
    %v591 = vpow.pop %v590
    %v592 = vmul.f32 %v587, 1.442695
    %v593 = vpow.pop %v592
    %v594 = vmul.f32 %v588, 1.442695
    %v595 = vpow.pop %v594
    %v596 = vmul.f32 %v589, 1.442695
    %v597 = vpow.pop %v596
    %v598 = vsel %vm325, %v591, 0.0
    %599 = vadd.xlane.f32.xlu0 %v598
    %v600 = vpop.xlane.xlu0 %599
    %v601 = vsel %vm325, %v593, 0.0
    %602 = vadd.xlane.f32.xlu0 %v601
    %v603 = vpop.xlane.xlu0 %602
    %v604 = vsel %vm325, %v595, 0.0
    %605 = vadd.xlane.f32.xlu0 %v604
    %v606 = vpop.xlane.xlu0 %605
    %v607 = vsel %vm325, %v597, 0.0
    %608 = vadd.xlane.f32.xlu0 %v607
    %v609 = vpop.xlane.xlu0 %608
    %v610 = vrcp.pop %v600
    %v611 = vmul.f32 %v600, %v610
    %v612 = vsub.f32 1.0, %v611
    %v613 = vmul.f32 %v610, %v612
    %v614 = vadd.f32 %v610, %v613
    %vm615 = vweird.f32 %v600
    %vm616 = vweird.f32 %v610
    %vm617 = vmor %vm615, %vm616
    %v618 = vsel %vm617, %v610, %v614
    %v619 = vand.u32 2147483647, %v600
    %vm620 = vcmp.eq.f32.partialorder %v619, 8.507059e+37
    %v621 = vand.u32 %v600, 2147483648
    %v622 = vor.u32 1.1754944e-38, %v621
    %v623 = vsel %vm620, %v622, %v618
    %v624 = vmul.f32 %v591, %v623
    %v625 = vrcp.pop %v603
    %v626 = vmul.f32 %v603, %v625
    %v627 = vsub.f32 1.0, %v626
    %v628 = vmul.f32 %v625, %v627
    %v629 = vadd.f32 %v625, %v628
    %vm630 = vweird.f32 %v603
    %vm631 = vweird.f32 %v625
    %vm632 = vmor %vm630, %vm631
    %v633 = vsel %vm632, %v625, %v629
    %v634 = vand.u32 2147483647, %v603
    %vm635 = vcmp.eq.f32.partialorder %v634, 8.507059e+37
    %v636 = vand.u32 %v603, 2147483648
    %v637 = vor.u32 1.1754944e-38, %v636
    %v638 = vsel %vm635, %v637, %v633
    %v639 = vmul.f32 %v593, %v638
    %v640 = vrcp.pop %v606
    %v641 = vmul.f32 %v606, %v640
    %v642 = vsub.f32 1.0, %v641
    %v643 = vmul.f32 %v640, %v642
    %v644 = vadd.f32 %v640, %v643
    %vm645 = vweird.f32 %v606
    %vm646 = vweird.f32 %v640
    %vm647 = vmor %vm645, %vm646
    %v648 = vsel %vm647, %v640, %v644
    %v649 = vand.u32 2147483647, %v606
    %vm650 = vcmp.eq.f32.partialorder %v649, 8.507059e+37
    %v651 = vand.u32 %v606, 2147483648
    %v652 = vor.u32 1.1754944e-38, %v651
    %v653 = vsel %vm650, %v652, %v648
    %v654 = vmul.f32 %v595, %v653
    %v655 = vrcp.pop %v609
    %v656 = vmul.f32 %v609, %v655
    %v657 = vsub.f32 1.0, %v656
    %v658 = vmul.f32 %v655, %v657
    %v659 = vadd.f32 %v655, %v658
    %vm660 = vweird.f32 %v609
    %vm661 = vweird.f32 %v655
    %vm662 = vmor %vm660, %vm661
    %v663 = vsel %vm662, %v655, %v659
    %v664 = vand.u32 2147483647, %v609
    %vm665 = vcmp.eq.f32.partialorder %v664, 8.507059e+37
    %v666 = vand.u32 %v609, 2147483648
    %v667 = vor.u32 1.1754944e-38, %v666
    %v668 = vsel %vm665, %v667, %v663
    %v669 = vmul.f32 %v597, %v668
    %670 = vrot.lane.b32.xlu0 %v235, 56
    %v671 = vpop.permute.xlu0 %670
    %672 = vrot.lane.b32.xlu0 %v238, 56
    %v673 = vpop.permute.xlu0 %672
    %v677 = vsel %vm325, %v624, 0
    %v680 = vsel %vm325, %v639, 0
    %682 = vmatpush.msra.mxu0 0.0
    %683 = vmatpush.msra.mxu0 0.0
    %684 = vmatpush.msra.mxu0 0.0
    %685 = vmatpush.msra.mxu0 0.0
    %686 = vmatpush.msra.mxu0 0.0
    %687 = vmatpush.msra.mxu0 0.0
    %688 = vmatpush.msra.mxu0 0.0
    %689 = vmatpush.msra.mxu0 0.0
    %690 = vmatpush.msra.mxu0 0.0
    %691 = vmatpush.msra.mxu0 0.0
    %692 = vmatpush.msra.mxu0 0.0
    %693 = vmatpush.msra.mxu0 0.0
    %694 = vmatpush.msra.mxu0 0.0
    %695 = vmatpush.msra.mxu0 0.0
    %696 = vmatpush.msra.mxu0 %v673
    %697 = vmatpush.msra.mxu0 %v671
    %698 = vmatmul.f32.gmra.mxu0 %v677
    %v699 = vpop.f32.mrf.mxu0
    %v700 = vadd.f32 0.0, %v699
    %701 = vmatmul.f32.gmra.mxu0 %v680
    %v702 = vpop.f32.mrf.mxu0
    %v703 = vadd.f32 0.0, %v702
    %704 = vdwg.mxu0
    %705 = vrot.lane.b32.xlu0 %v241, 56
    %v706 = vpop.permute.xlu0 %705
    %707 = vrot.lane.b32.xlu0 %v244, 56
    %v708 = vpop.permute.xlu0 %707
    %v712 = vsel %vm325, %v654, 0
    %v715 = vsel %vm325, %v669, 0
    %717 = vmatpush.msra.mxu0 0.0
    %718 = vmatpush.msra.mxu0 0.0
    %719 = vmatpush.msra.mxu0 0.0
    %720 = vmatpush.msra.mxu0 0.0
    %721 = vmatpush.msra.mxu0 0.0
    %722 = vmatpush.msra.mxu0 0.0
    %723 = vmatpush.msra.mxu0 0.0
    %724 = vmatpush.msra.mxu0 0.0
    %725 = vmatpush.msra.mxu0 0.0
    %726 = vmatpush.msra.mxu0 0.0
    %727 = vmatpush.msra.mxu0 0.0
    %728 = vmatpush.msra.mxu0 0.0
    %729 = vmatpush.msra.mxu0 0.0
    %730 = vmatpush.msra.mxu0 0.0
    %731 = vmatpush.msra.mxu0 %v708
    %732 = vmatpush.msra.mxu0 %v706
    %733 = vmatmul.f32.gmra.mxu0 %v712
    %v734 = vpop.f32.mrf.mxu0
    %v735 = vadd.f32 0.0, %v734
    %736 = vmatmul.f32.gmra.mxu0 %v715
    %v737 = vpop.f32.mrf.mxu0
    %v738 = vadd.f32 0.0, %v737
    %739 = vdwg.mxu0
    %v741 = vsel %vm252, %v700, 0
    %v744 = vsel %vm252, %v703, 0
    %v747 = vsel %vm252, %v735, 0
    %v750 = vsel %vm252, %v738, 0
    %752 = vmatpush.msra.mxu0 0.0
    %753 = vmatpush.msra.mxu0 0.0
    %754 = vmatpush.msra.mxu0 0.0
    %755 = vmatpush.msra.mxu0 0.0
    %756 = vmatpush.msra.mxu0 0.0
    %757 = vmatpush.msra.mxu0 0.0
    %758 = vmatpush.msra.mxu0 0.0
    %759 = vmatpush.msra.mxu0 0.0
    %760 = vmatpush.msra.mxu0 0.0
    %761 = vmatpush.msra.mxu0 0.0
    %762 = vmatpush.msra.mxu0 0.0
    %763 = vmatpush.msra.mxu0 0.0
    %764 = vmatpush.msra.mxu0 0.0
    %765 = vmatpush.msra.mxu0 0.0
    %766 = vmatpush.msra.mxu0 0.0
    %767 = vmatpush.msra.mxu0 %v80
    %768 = vmatmul.f32.gmra.mxu0 %v741
    %v769 = vpop.f32.mrf.mxu0
    %v770 = vadd.f32 0.0, %v769
    %771 = vmatmul.f32.gmra.mxu0 %v744
    %v772 = vpop.f32.mrf.mxu0
    %v773 = vadd.f32 0.0, %v772
    %774 = vmatmul.f32.gmra.mxu0 %v747
    %v775 = vpop.f32.mrf.mxu0
    %v776 = vadd.f32 0.0, %v775
    %777 = vmatmul.f32.gmra.mxu0 %v750
    %v778 = vpop.f32.mrf.mxu0
    %v779 = vadd.f32 0.0, %v778
    %780 = vdwg.mxu0
    %v782 = vsel %vm252, %v452, 0
    %v785 = vsel %vm252, %v455, 0
    %v788 = vsel %vm252, %v487, 0
    %v791 = vsel %vm252, %v490, 0
    %793 = vmatpush.msra.mxu0 0.0
    %794 = vmatpush.msra.mxu0 0.0
    %795 = vmatpush.msra.mxu0 0.0
    %796 = vmatpush.msra.mxu0 0.0
    %797 = vmatpush.msra.mxu0 0.0
    %798 = vmatpush.msra.mxu0 0.0
    %799 = vmatpush.msra.mxu0 0.0
    %800 = vmatpush.msra.mxu0 0.0
    %801 = vmatpush.msra.mxu0 0.0
    %802 = vmatpush.msra.mxu0 0.0
    %803 = vmatpush.msra.mxu0 0.0
    %804 = vmatpush.msra.mxu0 0.0
    %805 = vmatpush.msra.mxu0 0.0
    %806 = vmatpush.msra.mxu0 0.0
    %807 = vmatpush.msra.mxu0 0.0
    %808 = vmatpush.msra.mxu0 %v79
    %809 = vmatmul.f32.gmra.mxu0 %v782
    %v810 = vpop.f32.mrf.mxu0
    %v811 = vadd.f32 %v770, %v810
    %812 = vmatmul.f32.gmra.mxu0 %v785
    %v813 = vpop.f32.mrf.mxu0
    %v814 = vadd.f32 %v773, %v813
    %815 = vmatmul.f32.gmra.mxu0 %v788
    %v816 = vpop.f32.mrf.mxu0
    %v817 = vadd.f32 %v776, %v816
    %818 = vmatmul.f32.gmra.mxu0 %v791
    %v819 = vpop.f32.mrf.mxu0
    %v820 = vadd.f32 %v779, %v819
    %821 = vdwg.mxu0
    %822 = vrot.lane.b32.xlu0 %v235, 112
    %v823 = vpop.permute.xlu0 %822
    %824 = vrot.lane.b32.xlu0 %v238, 112
    %v825 = vpop.permute.xlu0 %824
    %826 = vrot.lane.b32.xlu0 %v235, 80
    %v827 = vpop.permute.xlu0 %826
    %828 = vrot.lane.b32.xlu0 %v238, 80
    %v829 = vpop.permute.xlu0 %828
    %v830 = vsel %vm252, %v823, 0
    %v832 = vsel %vm252, %v825, 0
    %v834 = vsel %vm252, %v827, 0
    %v836 = vsel %vm252, %v829, 0
    %838 = vmatpush.xpose.msra.mxu0 0.0
    %839 = vmatpush.xpose.msra.mxu0 0.0
    %840 = vmatpush.xpose.msra.mxu0 0.0
    %841 = vmatpush.xpose.msra.mxu0 0.0
    %842 = vmatpush.xpose.msra.mxu0 0.0
    %843 = vmatpush.xpose.msra.mxu0 0.0
    %844 = vmatpush.xpose.msra.mxu0 0.0
    %845 = vmatpush.xpose.msra.mxu0 0.0
    %846 = vmatpush.xpose.msra.mxu0 0.0
    %847 = vmatpush.xpose.msra.mxu0 0.0
    %848 = vmatpush.xpose.msra.mxu0 0.0
    %849 = vmatpush.xpose.msra.mxu0 0.0
    %850 = vmatpush.xpose.msra.mxu0 0.0
    %851 = vmatpush.xpose.msra.mxu0 0.0
    %852 = vmatpush.xpose.msra.mxu0 %v836
    %853 = vmatpush.xpose.msra.mxu0 %v834
    %854 = vmatmul.f32.gmra.mxu0 %v830
    %v855 = vpop.f32.mrf.mxu0
    %v856 = vadd.f32 0.0, %v855
    %857 = vmatmul.f32.gmra.mxu0 %v832
    %v858 = vpop.f32.mrf.mxu0
    %v859 = vadd.f32 0.0, %v858
    %860 = vdwg.mxu0
    %861 = vrot.lane.b32.xlu0 %v241, 112
    %v862 = vpop.permute.xlu0 %861
    %863 = vrot.lane.b32.xlu0 %v244, 112
    %v864 = vpop.permute.xlu0 %863
    %865 = vrot.lane.b32.xlu0 %v241, 80
    %v866 = vpop.permute.xlu0 %865
    %867 = vrot.lane.b32.xlu0 %v244, 80
    %v868 = vpop.permute.xlu0 %867
    %v869 = vsel %vm252, %v862, 0
    %v871 = vsel %vm252, %v864, 0
    %v873 = vsel %vm252, %v866, 0
    %v875 = vsel %vm252, %v868, 0
    %877 = vmatpush.xpose.msra.mxu0 0.0
    %878 = vmatpush.xpose.msra.mxu0 0.0
    %879 = vmatpush.xpose.msra.mxu0 0.0
    %880 = vmatpush.xpose.msra.mxu0 0.0
    %881 = vmatpush.xpose.msra.mxu0 0.0
    %882 = vmatpush.xpose.msra.mxu0 0.0
    %883 = vmatpush.xpose.msra.mxu0 0.0
    %884 = vmatpush.xpose.msra.mxu0 0.0
    %885 = vmatpush.xpose.msra.mxu0 0.0
    %886 = vmatpush.xpose.msra.mxu0 0.0
    %887 = vmatpush.xpose.msra.mxu0 0.0
    %888 = vmatpush.xpose.msra.mxu0 0.0
    %889 = vmatpush.xpose.msra.mxu0 0.0
    %890 = vmatpush.xpose.msra.mxu0 0.0
    %891 = vmatpush.xpose.msra.mxu0 %v875
    %892 = vmatpush.xpose.msra.mxu0 %v873
    %893 = vmatmul.f32.gmra.mxu0 %v869
    %v894 = vpop.f32.mrf.mxu0
    %v895 = vadd.f32 0.0, %v894
    %896 = vmatmul.f32.gmra.mxu0 %v871
    %v897 = vpop.f32.mrf.mxu0
    %v898 = vadd.f32 0.0, %v897
    %899 = vdwg.mxu0
    %v900 = vmul.f32 %v856, 0.35355338
    %v901 = vmul.f32 %v859, 0.35355338
    %v902 = vmul.f32 %v895, 0.35355338
    %v903 = vmul.f32 %v898, 0.35355338
    %v904 = vsel %vm325, %v900, -inf
    %905 = vmax.xlane.f32.xlu0 %v904
    %v906 = vpop.xlane.xlu0 %905
    %v907 = vsel %vm325, %v901, -inf
    %908 = vmax.xlane.f32.xlu0 %v907
    %v909 = vpop.xlane.xlu0 %908
    %v910 = vsel %vm325, %v902, -inf
    %911 = vmax.xlane.f32.xlu0 %v910
    %v912 = vpop.xlane.xlu0 %911
    %v913 = vsel %vm325, %v903, -inf
    %914 = vmax.xlane.f32.xlu0 %v913
    %v915 = vpop.xlane.xlu0 %914
    %v916 = vsub.f32 %v900, %v906
    %v917 = vsub.f32 %v901, %v909
    %v918 = vsub.f32 %v902, %v912
    %v919 = vsub.f32 %v903, %v915
    %v920 = vmul.f32 %v916, 1.442695
    %v921 = vpow.pop %v920
    %v922 = vmul.f32 %v917, 1.442695
    %v923 = vpow.pop %v922
    %v924 = vmul.f32 %v918, 1.442695
    %v925 = vpow.pop %v924
    %v926 = vmul.f32 %v919, 1.442695
    %v927 = vpow.pop %v926
    %v928 = vsel %vm325, %v921, 0.0
    %929 = vadd.xlane.f32.xlu0 %v928
    %v930 = vpop.xlane.xlu0 %929
    %v931 = vsel %vm325, %v923, 0.0
    %932 = vadd.xlane.f32.xlu0 %v931
    %v933 = vpop.xlane.xlu0 %932
    %v934 = vsel %vm325, %v925, 0.0
    %935 = vadd.xlane.f32.xlu0 %v934
    %v936 = vpop.xlane.xlu0 %935
    %v937 = vsel %vm325, %v927, 0.0
    %938 = vadd.xlane.f32.xlu0 %v937
    %v939 = vpop.xlane.xlu0 %938
    %v940 = vrcp.pop %v930
    %v941 = vmul.f32 %v930, %v940
    %v942 = vsub.f32 1.0, %v941
    %v943 = vmul.f32 %v940, %v942
    %v944 = vadd.f32 %v940, %v943
    %vm945 = vweird.f32 %v930
    %vm946 = vweird.f32 %v940
    %vm947 = vmor %vm945, %vm946
    %v948 = vsel %vm947, %v940, %v944
    %v949 = vand.u32 2147483647, %v930
    %vm950 = vcmp.eq.f32.partialorder %v949, 8.507059e+37
    %v951 = vand.u32 %v930, 2147483648
    %v952 = vor.u32 1.1754944e-38, %v951
    %v953 = vsel %vm950, %v952, %v948
    %v954 = vmul.f32 %v921, %v953
    %v955 = vrcp.pop %v933
    %v956 = vmul.f32 %v933, %v955
    %v957 = vsub.f32 1.0, %v956
    %v958 = vmul.f32 %v955, %v957
    %v959 = vadd.f32 %v955, %v958
    %vm960 = vweird.f32 %v933
    %vm961 = vweird.f32 %v955
    %vm962 = vmor %vm960, %vm961
    %v963 = vsel %vm962, %v955, %v959
    %v964 = vand.u32 2147483647, %v933
    %vm965 = vcmp.eq.f32.partialorder %v964, 8.507059e+37
    %v966 = vand.u32 %v933, 2147483648
    %v967 = vor.u32 1.1754944e-38, %v966
    %v968 = vsel %vm965, %v967, %v963
    %v969 = vmul.f32 %v923, %v968
    %v970 = vrcp.pop %v936
    %v971 = vmul.f32 %v936, %v970
    %v972 = vsub.f32 1.0, %v971
    %v973 = vmul.f32 %v970, %v972
    %v974 = vadd.f32 %v970, %v973
    %vm975 = vweird.f32 %v936
    %vm976 = vweird.f32 %v970
    %vm977 = vmor %vm975, %vm976
    %v978 = vsel %vm977, %v970, %v974
    %v979 = vand.u32 2147483647, %v936
    %vm980 = vcmp.eq.f32.partialorder %v979, 8.507059e+37
    %v981 = vand.u32 %v936, 2147483648
    %v982 = vor.u32 1.1754944e-38, %v981
    %v983 = vsel %vm980, %v982, %v978
    %v984 = vmul.f32 %v925, %v983
    %v985 = vrcp.pop %v939
    %v986 = vmul.f32 %v939, %v985
    %v987 = vsub.f32 1.0, %v986
    %v988 = vmul.f32 %v985, %v987
    %v989 = vadd.f32 %v985, %v988
    %vm990 = vweird.f32 %v939
    %vm991 = vweird.f32 %v985
    %vm992 = vmor %vm990, %vm991
    %v993 = vsel %vm992, %v985, %v989
    %v994 = vand.u32 2147483647, %v939
    %vm995 = vcmp.eq.f32.partialorder %v994, 8.507059e+37
    %v996 = vand.u32 %v939, 2147483648
    %v997 = vor.u32 1.1754944e-38, %v996
    %v998 = vsel %vm995, %v997, %v993
    %v999 = vmul.f32 %v927, %v998
    %1000 = vrot.lane.b32.xlu0 %v235, 48
    %v1001 = vpop.permute.xlu0 %1000
    %1002 = vrot.lane.b32.xlu0 %v238, 48
    %v1003 = vpop.permute.xlu0 %1002
    %v1007 = vsel %vm325, %v954, 0
    %v1010 = vsel %vm325, %v969, 0
    %1012 = vmatpush.msra.mxu0 0.0
    %1013 = vmatpush.msra.mxu0 0.0
    %1014 = vmatpush.msra.mxu0 0.0
    %1015 = vmatpush.msra.mxu0 0.0
    %1016 = vmatpush.msra.mxu0 0.0
    %1017 = vmatpush.msra.mxu0 0.0
    %1018 = vmatpush.msra.mxu0 0.0
    %1019 = vmatpush.msra.mxu0 0.0
    %1020 = vmatpush.msra.mxu0 0.0
    %1021 = vmatpush.msra.mxu0 0.0
    %1022 = vmatpush.msra.mxu0 0.0
    %1023 = vmatpush.msra.mxu0 0.0
    %1024 = vmatpush.msra.mxu0 0.0
    %1025 = vmatpush.msra.mxu0 0.0
    %1026 = vmatpush.msra.mxu0 %v1003
    %1027 = vmatpush.msra.mxu0 %v1001
    %1028 = vmatmul.f32.gmra.mxu0 %v1007
    %v1029 = vpop.f32.mrf.mxu0
    %v1030 = vadd.f32 0.0, %v1029
    %1031 = vmatmul.f32.gmra.mxu0 %v1010
    %v1032 = vpop.f32.mrf.mxu0
    %v1033 = vadd.f32 0.0, %v1032
    %1034 = vdwg.mxu0
    %1035 = vrot.lane.b32.xlu0 %v241, 48
    %v1036 = vpop.permute.xlu0 %1035
    %1037 = vrot.lane.b32.xlu0 %v244, 48
    %v1038 = vpop.permute.xlu0 %1037
    %v1042 = vsel %vm325, %v984, 0
    %v1045 = vsel %vm325, %v999, 0
    %1047 = vmatpush.msra.mxu0 0.0
    %1048 = vmatpush.msra.mxu0 0.0
    %1049 = vmatpush.msra.mxu0 0.0
    %1050 = vmatpush.msra.mxu0 0.0
    %1051 = vmatpush.msra.mxu0 0.0
    %1052 = vmatpush.msra.mxu0 0.0
    %1053 = vmatpush.msra.mxu0 0.0
    %1054 = vmatpush.msra.mxu0 0.0
    %1055 = vmatpush.msra.mxu0 0.0
    %1056 = vmatpush.msra.mxu0 0.0
    %1057 = vmatpush.msra.mxu0 0.0
    %1058 = vmatpush.msra.mxu0 0.0
    %1059 = vmatpush.msra.mxu0 0.0
    %1060 = vmatpush.msra.mxu0 0.0
    %1061 = vmatpush.msra.mxu0 %v1038
    %1062 = vmatpush.msra.mxu0 %v1036
    %1063 = vmatmul.f32.gmra.mxu0 %v1042
    %v1064 = vpop.f32.mrf.mxu0
    %v1065 = vadd.f32 0.0, %v1064
    %1066 = vmatmul.f32.gmra.mxu0 %v1045
    %v1067 = vpop.f32.mrf.mxu0
    %v1068 = vadd.f32 0.0, %v1067
    %1069 = vdwg.mxu0
    %v1071 = vsel %vm252, %v1030, 0
    %v1074 = vsel %vm252, %v1033, 0
    %v1077 = vsel %vm252, %v1065, 0
    %v1080 = vsel %vm252, %v1068, 0
    %1082 = vmatpush.msra.mxu0 0.0
    %1083 = vmatpush.msra.mxu0 0.0
    %1084 = vmatpush.msra.mxu0 0.0
    %1085 = vmatpush.msra.mxu0 0.0
    %1086 = vmatpush.msra.mxu0 0.0
    %1087 = vmatpush.msra.mxu0 0.0
    %1088 = vmatpush.msra.mxu0 0.0
    %1089 = vmatpush.msra.mxu0 0.0
    %1090 = vmatpush.msra.mxu0 0.0
    %1091 = vmatpush.msra.mxu0 0.0
    %1092 = vmatpush.msra.mxu0 0.0
    %1093 = vmatpush.msra.mxu0 0.0
    %1094 = vmatpush.msra.mxu0 0.0
    %1095 = vmatpush.msra.mxu0 0.0
    %1096 = vmatpush.msra.mxu0 0.0
    %1097 = vmatpush.msra.mxu0 %v81
    %1098 = vmatmul.f32.gmra.mxu0 %v1071
    %v1099 = vpop.f32.mrf.mxu0
    %v1100 = vadd.f32 0.0, %v1099
    %1101 = vmatmul.f32.gmra.mxu0 %v1074
    %v1102 = vpop.f32.mrf.mxu0
    %v1103 = vadd.f32 0.0, %v1102
    %1104 = vmatmul.f32.gmra.mxu0 %v1077
    %v1105 = vpop.f32.mrf.mxu0
    %v1106 = vadd.f32 0.0, %v1105
    %1107 = vmatmul.f32.gmra.mxu0 %v1080
    %v1108 = vpop.f32.mrf.mxu0
    %v1109 = vadd.f32 0.0, %v1108
    %1110 = vdwg.mxu0
    %v1111 = vadd.f32 %v811, %v1100
    %v1112 = vadd.f32 %v814, %v1103
    %v1113 = vadd.f32 %v817, %v1106
    %v1114 = vadd.f32 %v820, %v1109
    %1115 = vrot.lane.b32.xlu0 %v235, 104
    %v1116 = vpop.permute.xlu0 %1115
    %1117 = vrot.lane.b32.xlu0 %v238, 104
    %v1118 = vpop.permute.xlu0 %1117
    %1119 = vrot.lane.b32.xlu0 %v235, 72
    %v1120 = vpop.permute.xlu0 %1119
    %1121 = vrot.lane.b32.xlu0 %v238, 72
    %v1122 = vpop.permute.xlu0 %1121
    %v1123 = vsel %vm252, %v1116, 0
    %v1125 = vsel %vm252, %v1118, 0
    %v1127 = vsel %vm252, %v1120, 0
    %v1129 = vsel %vm252, %v1122, 0
    %1131 = vmatpush.xpose.msra.mxu0 0.0
    %1132 = vmatpush.xpose.msra.mxu0 0.0
    %1133 = vmatpush.xpose.msra.mxu0 0.0
    %1134 = vmatpush.xpose.msra.mxu0 0.0
    %1135 = vmatpush.xpose.msra.mxu0 0.0
    %1136 = vmatpush.xpose.msra.mxu0 0.0
    %1137 = vmatpush.xpose.msra.mxu0 0.0
    %1138 = vmatpush.xpose.msra.mxu0 0.0
    %1139 = vmatpush.xpose.msra.mxu0 0.0
    %1140 = vmatpush.xpose.msra.mxu0 0.0
    %1141 = vmatpush.xpose.msra.mxu0 0.0
    %1142 = vmatpush.xpose.msra.mxu0 0.0
    %1143 = vmatpush.xpose.msra.mxu0 0.0
    %1144 = vmatpush.xpose.msra.mxu0 0.0
    %1145 = vmatpush.xpose.msra.mxu0 %v1129
    %1146 = vmatpush.xpose.msra.mxu0 %v1127
    %1147 = vmatmul.f32.gmra.mxu0 %v1123
    %v1148 = vpop.f32.mrf.mxu0
    %v1149 = vadd.f32 0.0, %v1148
    %1150 = vmatmul.f32.gmra.mxu0 %v1125
    %v1151 = vpop.f32.mrf.mxu0
    %v1152 = vadd.f32 0.0, %v1151
    %1153 = vdwg.mxu0
    %1154 = vrot.lane.b32.xlu0 %v241, 104
    %v1155 = vpop.permute.xlu0 %1154
    %1156 = vrot.lane.b32.xlu0 %v244, 104
    %v1157 = vpop.permute.xlu0 %1156
    %1158 = vrot.lane.b32.xlu0 %v241, 72
    %v1159 = vpop.permute.xlu0 %1158
    %1160 = vrot.lane.b32.xlu0 %v244, 72
    %v1161 = vpop.permute.xlu0 %1160
    %v1162 = vsel %vm252, %v1155, 0
    %v1164 = vsel %vm252, %v1157, 0
    %v1166 = vsel %vm252, %v1159, 0
    %v1168 = vsel %vm252, %v1161, 0
    %1170 = vmatpush.xpose.msra.mxu0 0.0
    %1171 = vmatpush.xpose.msra.mxu0 0.0
    %1172 = vmatpush.xpose.msra.mxu0 0.0
    %1173 = vmatpush.xpose.msra.mxu0 0.0
    %1174 = vmatpush.xpose.msra.mxu0 0.0
    %1175 = vmatpush.xpose.msra.mxu0 0.0
    %1176 = vmatpush.xpose.msra.mxu0 0.0
    %1177 = vmatpush.xpose.msra.mxu0 0.0
    %1178 = vmatpush.xpose.msra.mxu0 0.0
    %1179 = vmatpush.xpose.msra.mxu0 0.0
    %1180 = vmatpush.xpose.msra.mxu0 0.0
    %1181 = vmatpush.xpose.msra.mxu0 0.0
    %1182 = vmatpush.xpose.msra.mxu0 0.0
    %1183 = vmatpush.xpose.msra.mxu0 0.0
    %1184 = vmatpush.xpose.msra.mxu0 %v1168
    %1185 = vmatpush.xpose.msra.mxu0 %v1166
    %1186 = vmatmul.f32.gmra.mxu0 %v1162
    %v1187 = vpop.f32.mrf.mxu0
    %v1188 = vadd.f32 0.0, %v1187
    %1189 = vmatmul.f32.gmra.mxu0 %v1164
    %v1190 = vpop.f32.mrf.mxu0
    %v1191 = vadd.f32 0.0, %v1190
    %1192 = vdwg.mxu0
    %v1193 = vmul.f32 %v1149, 0.35355338
    %v1194 = vmul.f32 %v1152, 0.35355338
    %v1195 = vmul.f32 %v1188, 0.35355338
    %v1196 = vmul.f32 %v1191, 0.35355338
    %v1197 = vsel %vm325, %v1193, -inf
    %1198 = vmax.xlane.f32.xlu0 %v1197
    %v1199 = vpop.xlane.xlu0 %1198
    %v1200 = vsel %vm325, %v1194, -inf
    %1201 = vmax.xlane.f32.xlu0 %v1200
    %v1202 = vpop.xlane.xlu0 %1201
    %v1203 = vsel %vm325, %v1195, -inf
    %1204 = vmax.xlane.f32.xlu0 %v1203
    %v1205 = vpop.xlane.xlu0 %1204
    %v1206 = vsel %vm325, %v1196, -inf
    %1207 = vmax.xlane.f32.xlu0 %v1206
    %v1208 = vpop.xlane.xlu0 %1207
    %v1209 = vsub.f32 %v1193, %v1199
    %v1210 = vsub.f32 %v1194, %v1202
    %v1211 = vsub.f32 %v1195, %v1205
    %v1212 = vsub.f32 %v1196, %v1208
    %v1213 = vmul.f32 %v1209, 1.442695
    %v1214 = vpow.pop %v1213
    %v1215 = vmul.f32 %v1210, 1.442695
    %v1216 = vpow.pop %v1215
    %v1217 = vmul.f32 %v1211, 1.442695
    %v1218 = vpow.pop %v1217
    %v1219 = vmul.f32 %v1212, 1.442695
    %v1220 = vpow.pop %v1219
    %v1221 = vsel %vm325, %v1214, 0.0
    %1222 = vadd.xlane.f32.xlu0 %v1221
    %v1223 = vpop.xlane.xlu0 %1222
    %v1224 = vsel %vm325, %v1216, 0.0
    %1225 = vadd.xlane.f32.xlu0 %v1224
    %v1226 = vpop.xlane.xlu0 %1225
    %v1227 = vsel %vm325, %v1218, 0.0
    %1228 = vadd.xlane.f32.xlu0 %v1227
    %v1229 = vpop.xlane.xlu0 %1228
    %v1230 = vsel %vm325, %v1220, 0.0
    %1231 = vadd.xlane.f32.xlu0 %v1230
    %v1232 = vpop.xlane.xlu0 %1231
    %v1233 = vrcp.pop %v1223
    %v1234 = vmul.f32 %v1223, %v1233
    %v1235 = vsub.f32 1.0, %v1234
    %v1236 = vmul.f32 %v1233, %v1235
    %v1237 = vadd.f32 %v1233, %v1236
    %vm1238 = vweird.f32 %v1223
    %vm1239 = vweird.f32 %v1233
    %vm1240 = vmor %vm1238, %vm1239
    %v1241 = vsel %vm1240, %v1233, %v1237
    %v1242 = vand.u32 2147483647, %v1223
    %vm1243 = vcmp.eq.f32.partialorder %v1242, 8.507059e+37
    %v1244 = vand.u32 %v1223, 2147483648
    %v1245 = vor.u32 1.1754944e-38, %v1244
    %v1246 = vsel %vm1243, %v1245, %v1241
    %v1247 = vmul.f32 %v1214, %v1246
    %v1248 = vrcp.pop %v1226
    %v1249 = vmul.f32 %v1226, %v1248
    %v1250 = vsub.f32 1.0, %v1249
    %v1251 = vmul.f32 %v1248, %v1250
    %v1252 = vadd.f32 %v1248, %v1251
    %vm1253 = vweird.f32 %v1226
    %vm1254 = vweird.f32 %v1248
    %vm1255 = vmor %vm1253, %vm1254
    %v1256 = vsel %vm1255, %v1248, %v1252
    %v1257 = vand.u32 2147483647, %v1226
    %vm1258 = vcmp.eq.f32.partialorder %v1257, 8.507059e+37
    %v1259 = vand.u32 %v1226, 2147483648
    %v1260 = vor.u32 1.1754944e-38, %v1259
    %v1261 = vsel %vm1258, %v1260, %v1256
    %v1262 = vmul.f32 %v1216, %v1261
    %v1263 = vrcp.pop %v1229
    %v1264 = vmul.f32 %v1229, %v1263
    %v1265 = vsub.f32 1.0, %v1264
    %v1266 = vmul.f32 %v1263, %v1265
    %v1267 = vadd.f32 %v1263, %v1266
    %vm1268 = vweird.f32 %v1229
    %vm1269 = vweird.f32 %v1263
    %vm1270 = vmor %vm1268, %vm1269
    %v1271 = vsel %vm1270, %v1263, %v1267
    %v1272 = vand.u32 2147483647, %v1229
    %vm1273 = vcmp.eq.f32.partialorder %v1272, 8.507059e+37
    %v1274 = vand.u32 %v1229, 2147483648
    %v1275 = vor.u32 1.1754944e-38, %v1274
    %v1276 = vsel %vm1273, %v1275, %v1271
    %v1277 = vmul.f32 %v1218, %v1276
    %v1278 = vrcp.pop %v1232
    %v1279 = vmul.f32 %v1232, %v1278
    %v1280 = vsub.f32 1.0, %v1279
    %v1281 = vmul.f32 %v1278, %v1280
    %v1282 = vadd.f32 %v1278, %v1281
    %vm1283 = vweird.f32 %v1232
    %vm1284 = vweird.f32 %v1278
    %vm1285 = vmor %vm1283, %vm1284
    %v1286 = vsel %vm1285, %v1278, %v1282
    %v1287 = vand.u32 2147483647, %v1232
    %vm1288 = vcmp.eq.f32.partialorder %v1287, 8.507059e+37
    %v1289 = vand.u32 %v1232, 2147483648
    %v1290 = vor.u32 1.1754944e-38, %v1289
    %v1291 = vsel %vm1288, %v1290, %v1286
    %v1292 = vmul.f32 %v1220, %v1291
    %1293 = vrot.lane.b32.xlu0 %v235, 40
    %v1294 = vpop.permute.xlu0 %1293
    %1295 = vrot.lane.b32.xlu0 %v238, 40
    %v1296 = vpop.permute.xlu0 %1295
    %v1300 = vsel %vm325, %v1247, 0
    %v1303 = vsel %vm325, %v1262, 0
    %1305 = vmatpush.msra.mxu0 0.0
    %1306 = vmatpush.msra.mxu0 0.0
    %1307 = vmatpush.msra.mxu0 0.0
    %1308 = vmatpush.msra.mxu0 0.0
    %1309 = vmatpush.msra.mxu0 0.0
    %1310 = vmatpush.msra.mxu0 0.0
    %1311 = vmatpush.msra.mxu0 0.0
    %1312 = vmatpush.msra.mxu0 0.0
    %1313 = vmatpush.msra.mxu0 0.0
    %1314 = vmatpush.msra.mxu0 0.0
    %1315 = vmatpush.msra.mxu0 0.0
    %1316 = vmatpush.msra.mxu0 0.0
    %1317 = vmatpush.msra.mxu0 0.0
    %1318 = vmatpush.msra.mxu0 0.0
    %1319 = vmatpush.msra.mxu0 %v1296
    %1320 = vmatpush.msra.mxu0 %v1294
    %1321 = vmatmul.f32.gmra.mxu0 %v1300
    %v1322 = vpop.f32.mrf.mxu0
    %v1323 = vadd.f32 0.0, %v1322
    %1324 = vmatmul.f32.gmra.mxu0 %v1303
    %v1325 = vpop.f32.mrf.mxu0
    %v1326 = vadd.f32 0.0, %v1325
    %1327 = vdwg.mxu0
    %1328 = vrot.lane.b32.xlu0 %v241, 40
    %v1329 = vpop.permute.xlu0 %1328
    %1330 = vrot.lane.b32.xlu0 %v244, 40
    %v1331 = vpop.permute.xlu0 %1330
    %v1335 = vsel %vm325, %v1277, 0
    %v1338 = vsel %vm325, %v1292, 0
    %1340 = vmatpush.msra.mxu0 0.0
    %1341 = vmatpush.msra.mxu0 0.0
    %1342 = vmatpush.msra.mxu0 0.0
    %1343 = vmatpush.msra.mxu0 0.0
    %1344 = vmatpush.msra.mxu0 0.0
    %1345 = vmatpush.msra.mxu0 0.0
    %1346 = vmatpush.msra.mxu0 0.0
    %1347 = vmatpush.msra.mxu0 0.0
    %1348 = vmatpush.msra.mxu0 0.0
    %1349 = vmatpush.msra.mxu0 0.0
    %1350 = vmatpush.msra.mxu0 0.0
    %1351 = vmatpush.msra.mxu0 0.0
    %1352 = vmatpush.msra.mxu0 0.0
    %1353 = vmatpush.msra.mxu0 0.0
    %1354 = vmatpush.msra.mxu0 %v1331
    %1355 = vmatpush.msra.mxu0 %v1329
    %1356 = vmatmul.f32.gmra.mxu0 %v1335
    %v1357 = vpop.f32.mrf.mxu0
    %v1358 = vadd.f32 0.0, %v1357
    %1359 = vmatmul.f32.gmra.mxu0 %v1338
    %v1360 = vpop.f32.mrf.mxu0
    %v1361 = vadd.f32 0.0, %v1360
    %1362 = vdwg.mxu0
    %v1364 = vsel %vm252, %v1323, 0
    %v1367 = vsel %vm252, %v1326, 0
    %v1370 = vsel %vm252, %v1358, 0
    %v1373 = vsel %vm252, %v1361, 0
    %1375 = vmatpush.msra.mxu0 0.0
    %1376 = vmatpush.msra.mxu0 0.0
    %1377 = vmatpush.msra.mxu0 0.0
    %1378 = vmatpush.msra.mxu0 0.0
    %1379 = vmatpush.msra.mxu0 0.0
    %1380 = vmatpush.msra.mxu0 0.0
    %1381 = vmatpush.msra.mxu0 0.0
    %1382 = vmatpush.msra.mxu0 0.0
    %1383 = vmatpush.msra.mxu0 0.0
    %1384 = vmatpush.msra.mxu0 0.0
    %1385 = vmatpush.msra.mxu0 0.0
    %1386 = vmatpush.msra.mxu0 0.0
    %1387 = vmatpush.msra.mxu0 0.0
    %1388 = vmatpush.msra.mxu0 0.0
    %1389 = vmatpush.msra.mxu0 0.0
    %1390 = vmatpush.msra.mxu0 %v82
    %1391 = vmatmul.f32.gmra.mxu0 %v1364
    %v1392 = vpop.f32.mrf.mxu0
    %v1393 = vadd.f32 0.0, %v1392
    %1394 = vmatmul.f32.gmra.mxu0 %v1367
    %v1395 = vpop.f32.mrf.mxu0
    %v1396 = vadd.f32 0.0, %v1395
    %1397 = vmatmul.f32.gmra.mxu0 %v1370
    %v1398 = vpop.f32.mrf.mxu0
    %v1399 = vadd.f32 0.0, %v1398
    %1400 = vmatmul.f32.gmra.mxu0 %v1373
    %v1401 = vpop.f32.mrf.mxu0
    %v1402 = vadd.f32 0.0, %v1401
    %1403 = vdwg.mxu0
    %v1404 = vadd.f32 %v1111, %v1393
    %v1405 = vadd.f32 %v1112, %v1396
    %v1406 = vadd.f32 %v1113, %v1399
    %v1407 = vadd.f32 %v1114, %v1402
    %v1408 = vld [vmem:[%s1 + $0xe] sm:$0x1]
    %v1409 = vperm.slane %v1408, 0
    %v1410 = vadd.f32 %v1404, %v1409
    %v1411 = vadd.f32 %v1405, %v1409
    %v1412 = vadd.f32 %v1406, %v1409
    %v1413 = vadd.f32 %v1407, %v1409
    %v1414 = vadd.f32 %v71, %v1410
    %v1415 = vadd.f32 %v72, %v1411
    %v1416 = vadd.f32 %v73, %v1412
    %v1417 = vadd.f32 %v74, %v1413
    %v1418 = vld [vmem:[%s1 + $0xf] sm:$0x1]
    %v1419 = vld [vmem:[%s1 + $0x10] sm:$0x1]
    %v1420 = vsel %vm97, %v1414, 0.0
    %1421 = vadd.xlane.f32.xlu0 %v1420
    %v1422 = vpop.xlane.xlu0 %1421
    %v1423 = vsel %vm97, %v1415, 0.0
    %1424 = vadd.xlane.f32.xlu0 %v1423
    %v1425 = vpop.xlane.xlu0 %1424
    %v1426 = vsel %vm97, %v1416, 0.0
    %1427 = vadd.xlane.f32.xlu0 %v1426
    %v1428 = vpop.xlane.xlu0 %1427
    %v1429 = vsel %vm97, %v1417, 0.0
    %1430 = vadd.xlane.f32.xlu0 %v1429
    %v1431 = vpop.xlane.xlu0 %1430
    %v1432 = vmul.f32 %v1422, %v116
    %v1433 = vmul.f32 %v1425, %v116
    %v1434 = vmul.f32 %v1428, %v116
    %v1435 = vmul.f32 %v1431, %v116
    %v1436 = vsub.f32 %v1414, %v1432
    %v1437 = vsub.f32 %v1415, %v1433
    %v1438 = vsub.f32 %v1416, %v1434
    %v1439 = vsub.f32 %v1417, %v1435
    %v1440 = vmul.f32 %v1436, %v1436
    %v1441 = vmul.f32 %v1437, %v1437
    %v1442 = vmul.f32 %v1438, %v1438
    %v1443 = vmul.f32 %v1439, %v1439
    %v1444 = vsel %vm97, %v1440, 0.0
    %1445 = vadd.xlane.f32.xlu0 %v1444
    %v1446 = vpop.xlane.xlu0 %1445
    %v1447 = vsel %vm97, %v1441, 0.0
    %1448 = vadd.xlane.f32.xlu0 %v1447
    %v1449 = vpop.xlane.xlu0 %1448
    %v1450 = vsel %vm97, %v1442, 0.0
    %1451 = vadd.xlane.f32.xlu0 %v1450
    %v1452 = vpop.xlane.xlu0 %1451
    %v1453 = vsel %vm97, %v1443, 0.0
    %1454 = vadd.xlane.f32.xlu0 %v1453
    %v1455 = vpop.xlane.xlu0 %1454
    %v1456 = vmul.f32 %v1446, %v116
    %v1457 = vmul.f32 %v1449, %v116
    %v1458 = vmul.f32 %v1452, %v116
    %v1459 = vmul.f32 %v1455, %v116
    %v1460 = vadd.f32 %v1456, 1e-06
    %v1461 = vadd.f32 %v1457, 1e-06
    %v1462 = vadd.f32 %v1458, 1e-06
    %v1463 = vadd.f32 %v1459, 1e-06
    %v1464 = vrsqrt.pop %v1460
    %v1465 = vmul.f32 %v1464, %v1460
    %v1466 = vmul.f32 %v1465, %v1464
    %v1467 = vmul.f32 0.5, %v1466
    %v1468 = vsub.f32 1.5, %v1467
    %v1469 = vmul.f32 %v1464, %v1468
    %vm1470 = vweird.f32 %v1460
    %vm1471 = vweird.f32 %v1464
    %vm1472 = vmor %vm1470, %vm1471
    %v1473 = vsel %vm1472, %v1464, %v1469
    %v1474 = vrsqrt.pop %v1461
    %v1475 = vmul.f32 %v1474, %v1461
    %v1476 = vmul.f32 %v1475, %v1474
    %v1477 = vmul.f32 0.5, %v1476
    %v1478 = vsub.f32 1.5, %v1477
    %v1479 = vmul.f32 %v1474, %v1478
    %vm1480 = vweird.f32 %v1461
    %vm1481 = vweird.f32 %v1474
    %vm1482 = vmor %vm1480, %vm1481
    %v1483 = vsel %vm1482, %v1474, %v1479
    %v1484 = vrsqrt.pop %v1462
    %v1485 = vmul.f32 %v1484, %v1462
    %v1486 = vmul.f32 %v1485, %v1484
    %v1487 = vmul.f32 0.5, %v1486
    %v1488 = vsub.f32 1.5, %v1487
    %v1489 = vmul.f32 %v1484, %v1488
    %vm1490 = vweird.f32 %v1462
    %vm1491 = vweird.f32 %v1484
    %vm1492 = vmor %vm1490, %vm1491
    %v1493 = vsel %vm1492, %v1484, %v1489
    %v1494 = vrsqrt.pop %v1463
    %v1495 = vmul.f32 %v1494, %v1463
    %v1496 = vmul.f32 %v1495, %v1494
    %v1497 = vmul.f32 0.5, %v1496
    %v1498 = vsub.f32 1.5, %v1497
    %v1499 = vmul.f32 %v1494, %v1498
    %vm1500 = vweird.f32 %v1463
    %vm1501 = vweird.f32 %v1494
    %vm1502 = vmor %vm1500, %vm1501
    %v1503 = vsel %vm1502, %v1494, %v1499
    %v1504 = vmul.f32 %v1436, %v1473
    %v1505 = vmul.f32 %v1437, %v1483
    %v1506 = vmul.f32 %v1438, %v1493
    %v1507 = vmul.f32 %v1439, %v1503
    %v1508 = vperm.slane %v1418, 0
    %v1509 = vmul.f32 %v1504, %v1508
    %v1510 = vmul.f32 %v1505, %v1508
    %v1511 = vmul.f32 %v1506, %v1508
    %v1512 = vmul.f32 %v1507, %v1508
    %v1513 = vperm.slane %v1419, 0
    %v1514 = vadd.f32 %v1509, %v1513
    %v1515 = vadd.f32 %v1510, %v1513
    %v1516 = vadd.f32 %v1511, %v1513
    %v1517 = vadd.f32 %v1512, %v1513
    %v1518 = vld [vmem:[%s1 + $0x11] sm:$0x1]
    %v1519 = vperm.slane %v1518, 0
    %v1521 = vsel %vm97, %v1514, 0
    %v1524 = vsel %vm97, %v1515, 0
    %v1527 = vsel %vm97, %v1516, 0
    %v1530 = vsel %vm97, %v1517, 0
    %1532 = vmatpush.msra.mxu0 0.0
    %1533 = vmatpush.msra.mxu0 0.0
    %1534 = vmatpush.msra.mxu0 0.0
    %1535 = vmatpush.msra.mxu0 0.0
    %1536 = vmatpush.msra.mxu0 0.0
    %1537 = vmatpush.msra.mxu0 0.0
    %1538 = vmatpush.msra.mxu0 0.0
    %1539 = vmatpush.msra.mxu0 0.0
    %1540 = vmatpush.msra.mxu0 0.0
    %1541 = vmatpush.msra.mxu0 0.0
    %1542 = vmatpush.msra.mxu0 0.0
    %1543 = vmatpush.msra.mxu0 0.0
    %1544 = vmatpush.msra.mxu0 %v86
    %1545 = vmatpush.msra.mxu0 %v85
    %1546 = vmatpush.msra.mxu0 %v84
    %1547 = vmatpush.msra.mxu0 %v83
    %1548 = vmatmul.f32.gmra.mxu0 %v1521
    %v1549 = vpop.f32.mrf.mxu0
    %v1550 = vadd.f32 %v1519, %v1549
    %1551 = vmatmul.f32.gmra.mxu0 %v1524
    %v1552 = vpop.f32.mrf.mxu0
    %v1553 = vadd.f32 %v1519, %v1552
    %1554 = vmatmul.f32.gmra.mxu0 %v1527
    %v1555 = vpop.f32.mrf.mxu0
    %v1556 = vadd.f32 %v1519, %v1555
    %1557 = vmatmul.f32.gmra.mxu0 %v1530
    %v1558 = vpop.f32.mrf.mxu0
    %v1559 = vadd.f32 %v1519, %v1558
    %1560 = vdwg.mxu0
    %v1561 = vmul.f32 %v1550, 0.5
    %v1562 = vmul.f32 %v1553, 0.5
    %v1563 = vmul.f32 %v1556, 0.5
    %v1564 = vmul.f32 %v1559, 0.5
    %v1565 = vmul.f32 %v1550, 0.044715
    %v1566 = vmul.f32 %v1553, 0.044715
    %v1567 = vmul.f32 %v1556, 0.044715
    %v1568 = vmul.f32 %v1559, 0.044715
    %v1569 = vmul.f32 %v1565, %v1550
    %v1570 = vmul.f32 %v1566, %v1553
    %v1571 = vmul.f32 %v1567, %v1556
    %v1572 = vmul.f32 %v1568, %v1559
    %v1573 = vmul.f32 %v1569, %v1550
    %v1574 = vmul.f32 %v1570, %v1553
    %v1575 = vmul.f32 %v1571, %v1556
    %v1576 = vmul.f32 %v1572, %v1559
    %v1577 = vadd.f32 %v1550, %v1573
    %v1578 = vadd.f32 %v1553, %v1574
    %v1579 = vadd.f32 %v1556, %v1575
    %v1580 = vadd.f32 %v1559, %v1576
    %v1581 = vmul.f32 %v1577, 0.7978846
    %v1582 = vmul.f32 %v1578, 0.7978846
    %v1583 = vmul.f32 %v1579, 0.7978846
    %v1584 = vmul.f32 %v1580, 0.7978846
    %v1585 = vtanh.pop %v1581
    %v1586 = vtanh.pop %v1582
    %v1587 = vtanh.pop %v1583
    %v1588 = vtanh.pop %v1584
    %v1589 = vadd.f32 %v1585, 1.0
    %v1590 = vadd.f32 %v1586, 1.0
    %v1591 = vadd.f32 %v1587, 1.0
    %v1592 = vadd.f32 %v1588, 1.0
    %v1593 = vmul.f32 %v1561, %v1589
    %v1594 = vmul.f32 %v1562, %v1590
    %v1595 = vmul.f32 %v1563, %v1591
    %v1596 = vmul.f32 %v1564, %v1592
    %v1597 = vld [vmem:[%s1 + $0x12] sm:$0x1]
    %v1598 = vperm.slane %v1597, 0
    %vm1599 = vcmask 523264
    %v1601 = vsel %vm1599, %v1593, 0
    %v1604 = vsel %vm1599, %v1594, 0
    %v1607 = vsel %vm1599, %v1595, 0
    %v1610 = vsel %vm1599, %v1596, 0
    %1612 = vmatpush.msra.mxu0 0.0
    %1613 = vmatpush.msra.mxu0 0.0
    %1614 = vmatpush.msra.mxu0 0.0
    %1615 = vmatpush.msra.mxu0 0.0
    %1616 = vmatpush.msra.mxu0 0.0
    %1617 = vmatpush.msra.mxu0 0.0
    %1618 = vmatpush.msra.mxu0 0.0
    %1619 = vmatpush.msra.mxu0 0.0
    %1620 = vmatpush.msra.mxu0 %v94
    %1621 = vmatpush.msra.mxu0 %v93
    %1622 = vmatpush.msra.mxu0 %v92
    %1623 = vmatpush.msra.mxu0 %v91
    %1624 = vmatpush.msra.mxu0 %v90
    %1625 = vmatpush.msra.mxu0 %v89
    %1626 = vmatpush.msra.mxu0 %v88
    %1627 = vmatpush.msra.mxu0 %v87
    %1628 = vmatmul.f32.gmra.mxu0 %v1601
    %v1629 = vpop.f32.mrf.mxu0
    %v1630 = vadd.f32 %v1598, %v1629
    %1631 = vmatmul.f32.gmra.mxu0 %v1604
    %v1632 = vpop.f32.mrf.mxu0
    %v1633 = vadd.f32 %v1598, %v1632
    %1634 = vmatmul.f32.gmra.mxu0 %v1607
    %v1635 = vpop.f32.mrf.mxu0
    %v1636 = vadd.f32 %v1598, %v1635
    %1637 = vmatmul.f32.gmra.mxu0 %v1610
    %v1638 = vpop.f32.mrf.mxu0
    %v1639 = vadd.f32 %v1598, %v1638
    %1640 = vdwg.mxu0
    %v1641 = vadd.f32 %v1414, %v1630
    %v1642 = vadd.f32 %v1415, %v1633
    %v1643 = vadd.f32 %v1416, %v1636
    %v1644 = vadd.f32 %v1417, %v1639
    %v1645 = vld [vmem:[%s1 + $0x1] sm:$0x1]
    %v1646 = vld [vmem:[%s1 + $0x2] sm:$0x1]
    %v1647 = vsel %vm97, %v1641, 0.0
    %1648 = vadd.xlane.f32.xlu0 %v1647
    %v1649 = vpop.xlane.xlu0 %1648
    %v1650 = vsel %vm97, %v1642, 0.0
    %1651 = vadd.xlane.f32.xlu0 %v1650
    %v1652 = vpop.xlane.xlu0 %1651
    %v1653 = vsel %vm97, %v1643, 0.0
    %1654 = vadd.xlane.f32.xlu0 %v1653
    %v1655 = vpop.xlane.xlu0 %1654
    %v1656 = vsel %vm97, %v1644, 0.0
    %1657 = vadd.xlane.f32.xlu0 %v1656
    %v1658 = vpop.xlane.xlu0 %1657
    %v1659 = vmul.f32 %v1649, %v116
    %v1660 = vmul.f32 %v1652, %v116
    %v1661 = vmul.f32 %v1655, %v116
    %v1662 = vmul.f32 %v1658, %v116
    %v1663 = vsub.f32 %v1641, %v1659
    %v1664 = vsub.f32 %v1642, %v1660
    %v1665 = vsub.f32 %v1643, %v1661
    %v1666 = vsub.f32 %v1644, %v1662
    %v1667 = vmul.f32 %v1663, %v1663
    %v1668 = vmul.f32 %v1664, %v1664
    %v1669 = vmul.f32 %v1665, %v1665
    %v1670 = vmul.f32 %v1666, %v1666
    %v1671 = vsel %vm97, %v1667, 0.0
    %1672 = vadd.xlane.f32.xlu0 %v1671
    %v1673 = vpop.xlane.xlu0 %1672
    %v1674 = vsel %vm97, %v1668, 0.0
    %1675 = vadd.xlane.f32.xlu0 %v1674
    %v1676 = vpop.xlane.xlu0 %1675
    %v1677 = vsel %vm97, %v1669, 0.0
    %1678 = vadd.xlane.f32.xlu0 %v1677
    %v1679 = vpop.xlane.xlu0 %1678
    %v1680 = vsel %vm97, %v1670, 0.0
    %1681 = vadd.xlane.f32.xlu0 %v1680
    %v1682 = vpop.xlane.xlu0 %1681
    %v1683 = vmul.f32 %v1673, %v116
    %v1684 = vmul.f32 %v1676, %v116
    %v1685 = vmul.f32 %v1679, %v116
    %v1686 = vmul.f32 %v1682, %v116
    %v1687 = vadd.f32 %v1683, 1e-06
    %v1688 = vadd.f32 %v1684, 1e-06
    %v1689 = vadd.f32 %v1685, 1e-06
    %v1690 = vadd.f32 %v1686, 1e-06
    %v1691 = vrsqrt.pop %v1687
    %v1692 = vmul.f32 %v1691, %v1687
    %v1693 = vmul.f32 %v1692, %v1691
    %v1694 = vmul.f32 0.5, %v1693
    %v1695 = vsub.f32 1.5, %v1694
    %v1696 = vmul.f32 %v1691, %v1695
    %vm1697 = vweird.f32 %v1687
    %vm1698 = vweird.f32 %v1691
    %vm1699 = vmor %vm1697, %vm1698
    %v1700 = vsel %vm1699, %v1691, %v1696
    %v1701 = vrsqrt.pop %v1688
    %v1702 = vmul.f32 %v1701, %v1688
    %v1703 = vmul.f32 %v1702, %v1701
    %v1704 = vmul.f32 0.5, %v1703
    %v1705 = vsub.f32 1.5, %v1704
    %v1706 = vmul.f32 %v1701, %v1705
    %vm1707 = vweird.f32 %v1688
    %vm1708 = vweird.f32 %v1701
    %vm1709 = vmor %vm1707, %vm1708
    %v1710 = vsel %vm1709, %v1701, %v1706
    %v1711 = vrsqrt.pop %v1689
    %v1712 = vmul.f32 %v1711, %v1689
    %v1713 = vmul.f32 %v1712, %v1711
    %v1714 = vmul.f32 0.5, %v1713
    %v1715 = vsub.f32 1.5, %v1714
    %v1716 = vmul.f32 %v1711, %v1715
    %vm1717 = vweird.f32 %v1689
    %vm1718 = vweird.f32 %v1711
    %vm1719 = vmor %vm1717, %vm1718
    %v1720 = vsel %vm1719, %v1711, %v1716
    %v1721 = vrsqrt.pop %v1690
    %v1722 = vmul.f32 %v1721, %v1690
    %v1723 = vmul.f32 %v1722, %v1721
    %v1724 = vmul.f32 0.5, %v1723
    %v1725 = vsub.f32 1.5, %v1724
    %v1726 = vmul.f32 %v1721, %v1725
    %vm1727 = vweird.f32 %v1690
    %vm1728 = vweird.f32 %v1721
    %vm1729 = vmor %vm1727, %vm1728
    %v1730 = vsel %vm1729, %v1721, %v1726
    %v1731 = vmul.f32 %v1663, %v1700
    %v1732 = vmul.f32 %v1664, %v1710
    %v1733 = vmul.f32 %v1665, %v1720
    %v1734 = vmul.f32 %v1666, %v1730
    %v1735 = vperm.slane %v1645, 0
    %v1736 = vmul.f32 %v1731, %v1735
    %v1737 = vmul.f32 %v1732, %v1735
    %v1738 = vmul.f32 %v1733, %v1735
    %v1739 = vmul.f32 %v1734, %v1735
    %v1740 = vperm.slane %v1646, 0
    %v1741 = vadd.f32 %v1736, %v1740
    %v1742 = vadd.f32 %v1737, %v1740
    %v1743 = vadd.f32 %v1738, %v1740
    %v1744 = vadd.f32 %v1739, %v1740
    %1745 = vst.msk [vmem:[#allocation2] sm:$0xff] %vm97, %v1741
    %1746 = vst.msk [vmem:[#allocation2 + $0x8] sm:$0xff] %vm97, %v1742
    %1747 = vst.msk [vmem:[#allocation2 + $0x10] sm:$0xff] %vm97, %v1743
    %1748 = vst.msk [vmem:[#allocation2 + $0x18] sm:$0xff] %vm97, %v1744
    // Predicated region
    $region14: #{siglip_vision_forward.1} parent=1 // pred_check
      _
    $region15: #{siglip_vision_forward.1} parent=1 // pred_check_branch
      %1750 = sbr.rel (0) target = $region17
    $region16: #{siglip_vision_forward.1} parent=1 // pred_region
      %1752 = vsyncadd [#allocation3], 0
      %s1753 = sshll.u32 [#allocation2], 4
      %s1754 = int_to_ptr.vmem [resolvable:$true] %s1753
      %s1755 = sshll.u32 %s3, 4
      %s1756 = int_to_ptr.hbm [resolvable:$true] %s1755
      %1761 = dma.vmem_to_hbm [thread:$0]  %s1754, 512, %s1756, [#allocation3], 128, 128, 8
    $region17: #{siglip_vision_forward.1} parent=1 // pred_fallthru
      _
    // Predicated region
    $region18: #{siglip_vision_forward.1} parent=1 // pred_check
      _
    $region19: #{siglip_vision_forward.1} parent=1 // pred_check_branch
      %1763 = sbr.rel (0) target = $region21
    $region20: #{siglip_vision_forward.1} parent=1 // pred_region
      %1765 = dma.done [#allocation3], 512
    $region21: #{siglip_vision_forward.1} parent=1 // pred_fallthru
      _
    %1766 = vsyncpa [#allocation3], 1

</llo_original>
